<compile_context>
chip_gen: v5e
topology: v5e:2x2
jax: 0.10.0
libtpu: 0.0.40
codegen_flags: <defaults>
</compile_context>

<pallas_src>
import functools

import jax
import jax.numpy as jnp
from jax.experimental import pallas as pl
from jax.experimental.pallas import tpu as pltpu

_MIB = 1024 * 1024


def _pick_tile(dim, candidates):
    """Largest candidate that divides `dim`; else the full dim (full-dim exception)."""
    for c in candidates:
        if dim % c == 0:
            return c
    return dim


def _vmem_limit(live_bytes):
    """Scoped-VMEM budget: above v5e's 16 MiB default, capped for v7x (64 MiB phys)."""
    return int(min(48 * _MIB, max(32 * _MIB, 2 * live_bytes)))


# ---------------------------------------------------------------------------
# Tiled linear:  y = x @ wt + b      (wt is the already-transposed torch weight)
# ---------------------------------------------------------------------------
def _linear_kernel(x_ref, wt_ref, b_ref, o_ref, acc_ref):
    k = pl.program_id(2)

    @pl.when(k == 0)
    def _():
        acc_ref[...] = jnp.zeros_like(acc_ref)

    acc_ref[...] += jnp.dot(
        x_ref[...], wt_ref[...], preferred_element_type=jnp.float32
    )

    @pl.when(k == pl.num_programs(2) - 1)
    def _():
        o_ref[...] = (
            acc_ref[...] + b_ref[...].astype(jnp.float32)
        ).astype(o_ref.dtype)


def linear(x, wt, b=None):
    """x: (M, K), wt: (K, N), b: (N,) or None -> (M, N)."""
    M, K = x.shape
    Kw, Nout = wt.shape
    assert K == Kw
    if b is None:
        b = jnp.zeros((Nout,), dtype=x.dtype)
    b2 = b.reshape(1, Nout).astype(x.dtype)

    # 256-granular tiles keep the v6e/v7x 256-wide MXU full and output stores
    # lane-dense; caps keep the double-buffered live set ~<20 MiB even in f32.
    tm = _pick_tile(M, (512, 256, 128, 64, 32, 16, 8))
    tn = _pick_tile(Nout, (1024, 512, 256, 128))
    tk = _pick_tile(K, (1024, 512, 256, 128))
    grid = (M // tm, Nout // tn, K // tk)

    isz = x.dtype.itemsize
    live = 2 * (tm * tk + tk * tn + tm * tn + tn) * isz + tm * tn * 4

    return pl.pallas_call(
        _linear_kernel,
        out_shape=jax.ShapeDtypeStruct((M, Nout), x.dtype),
        grid_spec=pltpu.PrefetchScalarGridSpec(
            num_scalar_prefetch=0,
            grid=grid,
            in_specs=[
                pl.BlockSpec((tm, tk), lambda i, j, k: (i, k)),
                pl.BlockSpec((tk, tn), lambda i, j, k: (k, j)),
                pl.BlockSpec((1, tn), lambda i, j, k: (0, j)),
            ],
            out_specs=pl.BlockSpec((tm, tn), lambda i, j, k: (i, j)),
            scratch_shapes=[pltpu.VMEM((tm, tn), jnp.float32)],
        ),
        compiler_params=pltpu.CompilerParams(
            dimension_semantics=("parallel", "parallel", "arbitrary"),
            vmem_limit_bytes=_vmem_limit(live),
        ),
    )(x, wt, b2)


# ---------------------------------------------------------------------------
# Flash-style multi-head attention, packing `hb` heads per grid step.
# ---------------------------------------------------------------------------
def _mha_kernel(q_ref, k_ref, v_ref, o_ref, q_sc, m_sc, l_sc, acc_sc, *, scale):
    kv = pl.program_id(2)

    @pl.when(kv == 0)
    def _():
        # q is invariant across the kv axis: scale/cast it once per (g, qi) tile.
        q_sc[...] = (q_ref[...] * scale).astype(q_sc.dtype)
        m_sc[...] = jnp.full_like(m_sc, -jnp.inf)
        l_sc[...] = jnp.zeros_like(l_sc)
        acc_sc[...] = jnp.zeros_like(acc_sc)

    q = q_sc[...]            # (hb, tq,  Dh)  -- native (bf16-ready) dtype
    k = k_ref[...]           # (hb, tkv, Dh)
    v = v_ref[...]           # (hb, tkv, Dh)

    # Batched over the packed-head axis; MXU fed in the input dtype, f32 acc.
    s = jnp.einsum("gqd,gkd->gqk", q, k, preferred_element_type=jnp.float32)

    m_prev = m_sc[...]
    m_new = jnp.maximum(m_prev, s.max(axis=-1, keepdims=True))
    alpha = jnp.exp(m_prev - m_new)
    p = jnp.exp(s - m_new)
    l_sc[...] = alpha * l_sc[...] + p.sum(axis=-1, keepdims=True)
    acc_sc[...] = alpha * acc_sc[...] + jnp.einsum(
        "gqk,gkd->gqd", p.astype(v.dtype), v, preferred_element_type=jnp.float32
    )
    m_sc[...] = m_new

    @pl.when(kv == pl.num_programs(2) - 1)
    def _():
        inv_l = pl.reciprocal(l_sc[...], approx=True)   # EUP slot, ~free
        o_ref[...] = (acc_sc[...] * inv_l).astype(o_ref.dtype)


def _pick_heads_per_block(G, Dh):
    """Largest divisor of G with hb*Dh ~<= 256: packs heads per grid step so a
    small head_dim still gives the MXU / stores substantial per-step work."""
    target = max(1, min(G, 256 // max(Dh, 1)))
    for c in range(target, 0, -1):
        if G % c == 0:
            return c
    return 1


def mha(qh, kh, vh, *, scale):
    """qh/kh/vh: (G, N, Dh) with G = B*H -> (G, N, Dh)."""
    G, N, Dh = qh.shape
    hb = _pick_heads_per_block(G, Dh)
    tq = _pick_tile(N, (256, 128))
    tkv = _pick_tile(N, (512, 256, 128))
    grid = (G // hb, N // tq, N // tkv)

    isz = qh.dtype.itemsize
    live = (
        2 * hb * (2 * tq * Dh + 2 * tkv * Dh) * isz   # double-buffered q/o + k/v
        + hb * tq * Dh * isz                          # cached q*scale scratch
        + hb * tq * (Dh + 2) * 4                      # f32 acc + m + l scratches
    )

    kernel = functools.partial(_mha_kernel, scale=scale)
    return pl.pallas_call(
        kernel,
        out_shape=jax.ShapeDtypeStruct((G, N, Dh), qh.dtype),
        grid_spec=pltpu.PrefetchScalarGridSpec(
            num_scalar_prefetch=0,
            grid=grid,
            in_specs=[
                pl.BlockSpec((hb, tq, Dh), lambda g, qi, ki: (g, qi, 0)),
                # TODO(synk): on v5e, pipeline_mode=pl.Buffered(3) on k/v hides
                # the re-streamed K/V DMA latency at negligible VMEM cost.
                pl.BlockSpec((hb, tkv, Dh), lambda g, qi, ki: (g, ki, 0)),
                pl.BlockSpec((hb, tkv, Dh), lambda g, qi, ki: (g, ki, 0)),
            ],
            out_specs=pl.BlockSpec((hb, tq, Dh), lambda g, qi, ki: (g, qi, 0)),
            scratch_shapes=[
                pltpu.VMEM((hb, tq, Dh), qh.dtype),     # cached q * scale
                pltpu.VMEM((hb, tq, 1), jnp.float32),   # running max m
                pltpu.VMEM((hb, tq, 1), jnp.float32),   # running denom l
                pltpu.VMEM((hb, tq, Dh), jnp.float32),  # output accumulator
            ],
        ),
        compiler_params=pltpu.CompilerParams(
            dimension_semantics=("parallel", "parallel", "arbitrary"),
            vmem_limit_bytes=_vmem_limit(live),
        ),
    )(qh, kh, vh)


# ---------------------------------------------------------------------------
# Full Attention.forward
# ---------------------------------------------------------------------------
def attention_forward(q_in, k_in, v_in, wq, wk, wv, wo, bo, *, num_heads):
    """q_in/k_in/v_in: (B, N, C); wq/wk/wv/wo: (C, C) [torch weight transposed];
    bo: (C,).  Returns (B, N, C)."""
    B, N, C = q_in.shape
    H = num_heads
    assert C % H == 0
    Dh = C // H

    # qkv_bias=False -> no bias on the three input projections.
    # TODO(synk): for self-attention (q_in is k_in is v_in) the three
    # projections could be fused into one (C, 3C) linear to read x once.
    q = linear(q_in.reshape(B * N, C), wq)
    k = linear(k_in.reshape(B * N, C), wk)
    v = linear(v_in.reshape(B * N, C), wv)

    def split_heads(x):
        # Kept as reshape/transpose because Dh < 128 here; with Dh % 128 == 0
        # this head split would instead be folded into the mha BlockSpecs.
        return x.reshape(B, N, H, Dh).transpose(0, 2, 1, 3).reshape(B * H, N, Dh)

    # TODO(synk): qk_norm=True would apply RMSNorm(head_dim) to q/k here;
    # the module default is qk_norm=False (Identity), so it is omitted.
    qh, kh, vh = split_heads(q), split_heads(k), split_heads(v)

    oh = mha(qh, kh, vh, scale=Dh ** -0.5)                    # (B*H, N, Dh)
    o = oh.reshape(B, H, N, Dh).transpose(0, 2, 1, 3).reshape(B * N, C)

    out = linear(o, wo, bo)                                   # proj has bias
    # attn_drop / proj_drop have p=0.0 -> identity.
    return out.reshape(B, N, C)


# ---------------------------------------------------------------------------
# Pure-JAX reference
# ---------------------------------------------------------------------------
def attention_ref(q_in, k_in, v_in, wq, wk, wv, wo, bo, *, num_heads):
    B, N, C = q_in.shape
    H = num_heads
    Dh = C // H
    hp = jax.lax.Precision.HIGHEST
    q = jnp.dot(q_in, wq, precision=hp)
    k = jnp.dot(k_in, wk, precision=hp)
    v = jnp.dot(v_in, wv, precision=hp)
    q = q.reshape(B, N, H, Dh).transpose(0, 2, 1, 3)
    k = k.reshape(B, N, H, Dh).transpose(0, 2, 1, 3)
    v = v.reshape(B, N, H, Dh).transpose(0, 2, 1, 3)
    s = jnp.einsum("bhqd,bhkd->bhqk", q, k, precision=hp) * (Dh ** -0.5)
    p = jax.nn.softmax(s, axis=-1)
    o = jnp.einsum("bhqk,bhkd->bhqd", p, v, precision=hp)
    o = o.transpose(0, 2, 1, 3).reshape(B, N, C)
    return jnp.dot(o, wo, precision=hp) + bo


if __name__ == "__main__":
    key = jax.random.PRNGKey(0)
    B, N, C, H = 2, 8, 32, 4   # dim=32, num_heads=4 -> head_dim=8

    ks = jax.random.split(key, 8)
    q_in = jax.random.normal(ks[0], (B, N, C), dtype=jnp.float32)
    k_in = jax.random.normal(ks[1], (B, N, C), dtype=jnp.float32)
    v_in = jax.random.normal(ks[2], (B, N, C), dtype=jnp.float32)

    init = C ** -0.5
    # Weights stored as (in, out) = torch W.T; proj bias as (C,).
    wq = jax.random.normal(ks[3], (C, C), dtype=jnp.float32) * init
    wk = jax.random.normal(ks[4], (C, C), dtype=jnp.float32) * init
    wv = jax.random.normal(ks[5], (C, C), dtype=jnp.float32) * init
    wo = jax.random.normal(ks[6], (C, C), dtype=jnp.float32) * init
    bo = jax.random.normal(ks[7], (C,), dtype=jnp.float32) * init

    fwd = jax.jit(functools.partial(attention_forward, num_heads=H))
    out = jax.block_until_ready(fwd(q_in, k_in, v_in, wq, wk, wv, wo, bo))

    ref = attention_ref(q_in, k_in, v_in, wq, wk, wv, wo, bo, num_heads=H)

    assert out.shape == (B, N, C)
    # f32 end-to-end; tolerance covers MXU f32-pass precision and the EUP
    # approx-reciprocal epilogue.
    assert jnp.allclose(out, ref, atol=2e-2, rtol=2e-2), float(
        jnp.max(jnp.abs(out - ref))
    )

    print("KERNEL_OK")
</pallas_src>

<mosaic_0001>
module attributes {stable_mosaic.version = 11 : i64} {
  func.func @_linear_kernel(%arg0: i32, %arg1: i32, %arg2: i32, %arg3: memref<16x32xf32, #tpu.memory_space<vmem>>, %arg4: memref<32x32xf32, #tpu.memory_space<vmem>>, %arg5: memref<1x32xf32, #tpu.memory_space<vmem>>, %arg6: memref<16x32xf32, #tpu.memory_space<vmem>>, %arg7: memref<16x32xf32, #tpu.memory_space<vmem>>) attributes {dimension_semantics = [#tpu.dimension_semantics<parallel>, #tpu.dimension_semantics<parallel>, #tpu.dimension_semantics<arbitrary>], iteration_bounds = array<i64: 1, 1, 1>, scalar_prefetch = 0 : i64, scratch_operands = 1 : i64, tpu.core_type = #tpu.core_type<tc>, window_params = [{transform_indices = @transform_0, window_bounds = array<i64: 16, 32>}, {transform_indices = @transform_1, window_bounds = array<i64: 32, 32>}, {transform_indices = @transform_2, window_bounds = array<i64: 1, 32>}, {transform_indices = @transform_3, window_bounds = array<i64: 16, 32>}]} {
    %c0_i32 = arith.constant 0 : i32
    %0 = arith.cmpi eq, %arg2, %c0_i32 : i32
    %1 = arith.extui %0 : i1 to i32
    %c0_i32_0 = arith.constant 0 : i32
    %2 = arith.cmpi ne, %1, %c0_i32_0 : i32
    scf.if %2 {
      %cst_10 = arith.constant 0.000000e+00 : f32
      %12 = vector.broadcast %cst_10 : f32 to vector<16x32xf32>
      %c0_11 = arith.constant 0 : index
      %c0_12 = arith.constant 0 : index
      %13 = vector.load %arg7[%c0_11, %c0_12] : memref<16x32xf32, #tpu.memory_space<vmem>>, vector<16x32xf32>
      tpu.vector_store %arg7[%c0_11, %c0_12], %12 {strides = array<i32>} : memref<16x32xf32, #tpu.memory_space<vmem>>, vector<16x32xf32>,
    } else {
    }
    %c0 = arith.constant 0 : index
    %c0_1 = arith.constant 0 : index
    %3 = vector.load %arg7[%c0, %c0_1] : memref<16x32xf32, #tpu.memory_space<vmem>>, vector<16x32xf32>
    %c0_2 = arith.constant 0 : index
    %c0_3 = arith.constant 0 : index
    %4 = vector.load %arg3[%c0_2, %c0_3] : memref<16x32xf32, #tpu.memory_space<vmem>>, vector<16x32xf32>
    %c0_4 = arith.constant 0 : index
    %c0_5 = arith.constant 0 : index
    %5 = vector.load %arg4[%c0_4, %c0_5] : memref<32x32xf32, #tpu.memory_space<vmem>>, vector<32x32xf32>
    %cst = arith.constant dense<0.000000e+00> : vector<16x32xf32>
    %6 = tpu.matmul %4, %5, %cst {dimension_numbers = #tpu.dot_dimension_numbers<[1], [0], [0], [1], [0, 0, 1, 1], [], []>} : vector<16x32xf32>, vector<32x32xf32>, vector<16x32xf32> -> vector<16x32xf32>
    %7 = arith.addf %3, %6 : vector<16x32xf32>
    %c0_6 = arith.constant 0 : index
    %c0_7 = arith.constant 0 : index
    %8 = vector.load %arg7[%c0_6, %c0_7] : memref<16x32xf32, #tpu.memory_space<vmem>>, vector<16x32xf32>
    tpu.vector_store %arg7[%c0_6, %c0_7], %7 {strides = array<i32>} : memref<16x32xf32, #tpu.memory_space<vmem>>, vector<16x32xf32>,
    %c0_i32_8 = arith.constant 0 : i32
    %9 = arith.cmpi eq, %arg2, %c0_i32_8 : i32
    %10 = arith.extui %9 : i1 to i32
    %c0_i32_9 = arith.constant 0 : i32
    %11 = arith.cmpi ne, %10, %c0_i32_9 : i32
    scf.if %11 {
      %c0_10 = arith.constant 0 : index
      %c0_11 = arith.constant 0 : index
      %12 = vector.load %arg7[%c0_10, %c0_11] : memref<16x32xf32, #tpu.memory_space<vmem>>, vector<16x32xf32>
      %c0_12 = arith.constant 0 : index
      %c0_13 = arith.constant 0 : index
      %13 = vector.load %arg5[%c0_12, %c0_13] : memref<1x32xf32, #tpu.memory_space<vmem>>, vector<1x32xf32>
      %14 = vector.broadcast %13 : vector<1x32xf32> to vector<16x32xf32>
      %15 = arith.addf %12, %14 : vector<16x32xf32>
      %c0_14 = arith.constant 0 : index
      %c0_15 = arith.constant 0 : index
      %16 = vector.load %arg6[%c0_14, %c0_15] : memref<16x32xf32, #tpu.memory_space<vmem>>, vector<16x32xf32>
      tpu.vector_store %arg6[%c0_14, %c0_15], %15 {strides = array<i32>} : memref<16x32xf32, #tpu.memory_space<vmem>>, vector<16x32xf32>,
    } else {
    }
    return
  }
  func.func @transform_0(%arg0: i32, %arg1: i32, %arg2: i32) -> (i32, i32) {
    %c0_i32 = arith.constant 0 : i32
    return %arg0, %arg2 : i32, i32
  }
  func.func @transform_1(%arg0: i32, %arg1: i32, %arg2: i32) -> (i32, i32) {
    %c0_i32 = arith.constant 0 : i32
    return %arg2, %arg1 : i32, i32
  }
  func.func @transform_2(%arg0: i32, %arg1: i32, %arg2: i32) -> (i32, i32) {
    %c0_i32 = arith.constant 0 : i32
    %c0_i32_0 = arith.constant 0 : i32
    return %c0_i32, %arg1 : i32, i32
  }
  func.func @transform_3(%arg0: i32, %arg1: i32, %arg2: i32) -> (i32, i32) {
    %c0_i32 = arith.constant 0 : i32
    return %arg0, %arg1 : i32, i32
  }
}

module attributes {stable_mosaic.version = 11 : i64} {
  func.func @_linear_kernel(%arg0: i32, %arg1: i32, %arg2: i32, %arg3: memref<16x32xf32, #tpu.memory_space<vmem>>, %arg4: memref<32x32xf32, #tpu.memory_space<vmem>>, %arg5: memref<1x32xf32, #tpu.memory_space<vmem>>, %arg6: memref<16x32xf32, #tpu.memory_space<vmem>>, %arg7: memref<16x32xf32, #tpu.memory_space<vmem>>) attributes {dimension_semantics = [#tpu.dimension_semantics<parallel>, #tpu.dimension_semantics<parallel>, #tpu.dimension_semantics<arbitrary>], iteration_bounds = array<i64: 1, 1, 1>, scalar_prefetch = 0 : i64, scratch_operands = 1 : i64, tpu.core_type = #tpu.core_type<tc>, window_params = [{transform_indices = @transform_0, window_bounds = array<i64: 16, 32>}, {transform_indices = @transform_1, window_bounds = array<i64: 32, 32>}, {transform_indices = @transform_2, window_bounds = array<i64: 1, 32>}, {transform_indices = @transform_3, window_bounds = array<i64: 16, 32>}]} {
    %c0_i32 = arith.constant 0 : i32
    %0 = arith.cmpi eq, %arg2, %c0_i32 : i32
    %1 = arith.extui %0 : i1 to i32
    %c0_i32_0 = arith.constant 0 : i32
    %2 = arith.cmpi ne, %1, %c0_i32_0 : i32
    scf.if %2 {
      %cst_10 = arith.constant 0.000000e+00 : f32
      %12 = vector.broadcast %cst_10 : f32 to vector<16x32xf32>
      %c0_11 = arith.constant 0 : index
      %c0_12 = arith.constant 0 : index
      %13 = vector.load %arg7[%c0_11, %c0_12] : memref<16x32xf32, #tpu.memory_space<vmem>>, vector<16x32xf32>
      tpu.vector_store %arg7[%c0_11, %c0_12], %12 {strides = array<i32>} : memref<16x32xf32, #tpu.memory_space<vmem>>, vector<16x32xf32>,
    } else {
    }
    %c0 = arith.constant 0 : index
    %c0_1 = arith.constant 0 : index
    %3 = vector.load %arg7[%c0, %c0_1] : memref<16x32xf32, #tpu.memory_space<vmem>>, vector<16x32xf32>
    %c0_2 = arith.constant 0 : index
    %c0_3 = arith.constant 0 : index
    %4 = vector.load %arg3[%c0_2, %c0_3] : memref<16x32xf32, #tpu.memory_space<vmem>>, vector<16x32xf32>
    %c0_4 = arith.constant 0 : index
    %c0_5 = arith.constant 0 : index
    %5 = vector.load %arg4[%c0_4, %c0_5] : memref<32x32xf32, #tpu.memory_space<vmem>>, vector<32x32xf32>
    %cst = arith.constant dense<0.000000e+00> : vector<16x32xf32>
    %6 = tpu.matmul %4, %5, %cst {dimension_numbers = #tpu.dot_dimension_numbers<[1], [0], [0], [1], [0, 0, 1, 1], [], []>} : vector<16x32xf32>, vector<32x32xf32>, vector<16x32xf32> -> vector<16x32xf32>
    %7 = arith.addf %3, %6 : vector<16x32xf32>
    %c0_6 = arith.constant 0 : index
    %c0_7 = arith.constant 0 : index
    %8 = vector.load %arg7[%c0_6, %c0_7] : memref<16x32xf32, #tpu.memory_space<vmem>>, vector<16x32xf32>
    tpu.vector_store %arg7[%c0_6, %c0_7], %7 {strides = array<i32>} : memref<16x32xf32, #tpu.memory_space<vmem>>, vector<16x32xf32>,
    %c0_i32_8 = arith.constant 0 : i32
    %9 = arith.cmpi eq, %arg2, %c0_i32_8 : i32
    %10 = arith.extui %9 : i1 to i32
    %c0_i32_9 = arith.constant 0 : i32
    %11 = arith.cmpi ne, %10, %c0_i32_9 : i32
    scf.if %11 {
      %c0_10 = arith.constant 0 : index
      %c0_11 = arith.constant 0 : index
      %12 = vector.load %arg7[%c0_10, %c0_11] : memref<16x32xf32, #tpu.memory_space<vmem>>, vector<16x32xf32>
      %c0_12 = arith.constant 0 : index
      %c0_13 = arith.constant 0 : index
      %13 = vector.load %arg5[%c0_12, %c0_13] : memref<1x32xf32, #tpu.memory_space<vmem>>, vector<1x32xf32>
      %14 = vector.broadcast %13 : vector<1x32xf32> to vector<16x32xf32>
      %15 = arith.addf %12, %14 : vector<16x32xf32>
      %c0_14 = arith.constant 0 : index
      %c0_15 = arith.constant 0 : index
      %16 = vector.load %arg6[%c0_14, %c0_15] : memref<16x32xf32, #tpu.memory_space<vmem>>, vector<16x32xf32>
      tpu.vector_store %arg6[%c0_14, %c0_15], %15 {strides = array<i32>} : memref<16x32xf32, #tpu.memory_space<vmem>>, vector<16x32xf32>,
    } else {
    }
    return
  }
  func.func @transform_0(%arg0: i32, %arg1: i32, %arg2: i32) -> (i32, i32) {
    %c0_i32 = arith.constant 0 : i32
    return %arg0, %arg2 : i32, i32
  }
  func.func @transform_1(%arg0: i32, %arg1: i32, %arg2: i32) -> (i32, i32) {
    %c0_i32 = arith.constant 0 : i32
    return %arg2, %arg1 : i32, i32
  }
  func.func @transform_2(%arg0: i32, %arg1: i32, %arg2: i32) -> (i32, i32) {
    %c0_i32 = arith.constant 0 : i32
    %c0_i32_0 = arith.constant 0 : i32
    return %c0_i32, %arg1 : i32, i32
  }
  func.func @transform_3(%arg0: i32, %arg1: i32, %arg2: i32) -> (i32, i32) {
    %c0_i32 = arith.constant 0 : i32
    return %arg0, %arg1 : i32, i32
  }
}

module attributes {stable_mosaic.version = 11 : i64} {
  func.func @_mha_kernel(%arg0: i32, %arg1: i32, %arg2: i32, %arg3: memref<8x8x8xf32, #tpu.memory_space<vmem>>, %arg4: memref<8x8x8xf32, #tpu.memory_space<vmem>>, %arg5: memref<8x8x8xf32, #tpu.memory_space<vmem>>, %arg6: memref<8x8x8xf32, #tpu.memory_space<vmem>>, %arg7: memref<8x8x8xf32, #tpu.memory_space<vmem>>, %arg8: memref<8x8x1xf32, #tpu.memory_space<vmem>>, %arg9: memref<8x8x1xf32, #tpu.memory_space<vmem>>, %arg10: memref<8x8x8xf32, #tpu.memory_space<vmem>>) attributes {dimension_semantics = [#tpu.dimension_semantics<parallel>, #tpu.dimension_semantics<parallel>, #tpu.dimension_semantics<arbitrary>], iteration_bounds = array<i64: 1, 1, 1>, scalar_prefetch = 0 : i64, scratch_operands = 4 : i64, tpu.core_type = #tpu.core_type<tc>, window_params = [{transform_indices = @transform_0, window_bounds = array<i64: 8, 8, 8>}, {transform_indices = @transform_1, window_bounds = array<i64: 8, 8, 8>}, {transform_indices = @transform_2, window_bounds = array<i64: 8, 8, 8>}, {transform_indices = @transform_3, window_bounds = array<i64: 8, 8, 8>}]} {
    %c0_i32 = arith.constant 0 : i32
    %0 = arith.cmpi eq, %arg2, %c0_i32 : i32
    %1 = arith.extui %0 : i1 to i32
    %c0_i32_0 = arith.constant 0 : i32
    %2 = arith.cmpi ne, %1, %c0_i32_0 : i32
    scf.if %2 {
      %c0_32 = arith.constant 0 : index
      %c0_33 = arith.constant 0 : index
      %c0_34 = arith.constant 0 : index
      %32 = vector.load %arg3[%c0_32, %c0_33, %c0_34] : memref<8x8x8xf32, #tpu.memory_space<vmem>>, vector<8x8x8xf32>
      %cst_35 = arith.constant 0.353553385 : f32
      %33 = vector.broadcast %cst_35 : f32 to vector<8x8x8xf32>
      %34 = arith.mulf %32, %33 : vector<8x8x8xf32>
      %c0_36 = arith.constant 0 : index
      %c0_37 = arith.constant 0 : index
      %c0_38 = arith.constant 0 : index
      %35 = vector.load %arg7[%c0_36, %c0_37, %c0_38] : memref<8x8x8xf32, #tpu.memory_space<vmem>>, vector<8x8x8xf32>
      tpu.vector_store %arg7[%c0_36, %c0_37, %c0_38], %34 {strides = array<i32>} : memref<8x8x8xf32, #tpu.memory_space<vmem>>, vector<8x8x8xf32>,
      %cst_39 = arith.constant 0xFF800000 : f32
      %36 = vector.broadcast %cst_39 : f32 to vector<8x8x1xf32>
      %c0_40 = arith.constant 0 : index
      %c0_41 = arith.constant 0 : index
      %c0_42 = arith.constant 0 : index
      %37 = vector.load %arg8[%c0_40, %c0_41, %c0_42] : memref<8x8x1xf32, #tpu.memory_space<vmem>>, vector<8x8x1xf32>
      tpu.vector_store %arg8[%c0_40, %c0_41, %c0_42], %36 {strides = array<i32>} : memref<8x8x1xf32, #tpu.memory_space<vmem>>, vector<8x8x1xf32>,
      %cst_43 = arith.constant 0.000000e+00 : f32
      %38 = vector.broadcast %cst_43 : f32 to vector<8x8x1xf32>
      %c0_44 = arith.constant 0 : index
      %c0_45 = arith.constant 0 : index
      %c0_46 = arith.constant 0 : index
      %39 = vector.load %arg9[%c0_44, %c0_45, %c0_46] : memref<8x8x1xf32, #tpu.memory_space<vmem>>, vector<8x8x1xf32>
      tpu.vector_store %arg9[%c0_44, %c0_45, %c0_46], %38 {strides = array<i32>} : memref<8x8x1xf32, #tpu.memory_space<vmem>>, vector<8x8x1xf32>,
      %cst_47 = arith.constant 0.000000e+00 : f32
      %40 = vector.broadcast %cst_47 : f32 to vector<8x8x8xf32>
      %c0_48 = arith.constant 0 : index
      %c0_49 = arith.constant 0 : index
      %c0_50 = arith.constant 0 : index
      %41 = vector.load %arg10[%c0_48, %c0_49, %c0_50] : memref<8x8x8xf32, #tpu.memory_space<vmem>>, vector<8x8x8xf32>
      tpu.vector_store %arg10[%c0_48, %c0_49, %c0_50], %40 {strides = array<i32>} : memref<8x8x8xf32, #tpu.memory_space<vmem>>, vector<8x8x8xf32>,
    } else {
    }
    %c0 = arith.constant 0 : index
    %c0_1 = arith.constant 0 : index
    %c0_2 = arith.constant 0 : index
    %3 = vector.load %arg7[%c0, %c0_1, %c0_2] : memref<8x8x8xf32, #tpu.memory_space<vmem>>, vector<8x8x8xf32>
    %c0_3 = arith.constant 0 : index
    %c0_4 = arith.constant 0 : index
    %c0_5 = arith.constant 0 : index
    %4 = vector.load %arg4[%c0_3, %c0_4, %c0_5] : memref<8x8x8xf32, #tpu.memory_space<vmem>>, vector<8x8x8xf32>
    %c0_6 = arith.constant 0 : index
    %c0_7 = arith.constant 0 : index
    %c0_8 = arith.constant 0 : index
    %5 = vector.load %arg5[%c0_6, %c0_7, %c0_8] : memref<8x8x8xf32, #tpu.memory_space<vmem>>, vector<8x8x8xf32>
    "tpu.trace_start"() <{level = 10 : i32, message = "gqd,gkd->gqk"}> : () -> ()
    %cst = arith.constant dense<0.000000e+00> : vector<8x8x8xf32>
    %6 = tpu.matmul %3, %4, %cst {dimension_numbers = #tpu.dot_dimension_numbers<[2], [2], [1], [1], [0, 0, 0, 1, 1, 1], [0], [0]>} : vector<8x8x8xf32>, vector<8x8x8xf32>, vector<8x8x8xf32> -> vector<8x8x8xf32>
    "tpu.trace_stop"() : () -> ()
    %c0_9 = arith.constant 0 : index
    %c0_10 = arith.constant 0 : index
    %c0_11 = arith.constant 0 : index
    %7 = vector.load %arg8[%c0_9, %c0_10, %c0_11] : memref<8x8x1xf32, #tpu.memory_space<vmem>>, vector<8x8x1xf32>
    %cst_12 = arith.constant dense<0xFF800000> : vector<8x8xf32>
    %8 = vector.multi_reduction <maximumf>, %6, %cst_12 [2] : vector<8x8x8xf32> to vector<8x8xf32>
    %9 = vector.shape_cast %8 : vector<8x8xf32> to vector<8x8x1xf32>
    %10 = arith.maximumf %7, %9 : vector<8x8x1xf32>
    %11 = arith.subf %7, %10 : vector<8x8x1xf32>
    %12 = math.exp %11 : vector<8x8x1xf32>
    %13 = vector.broadcast %10 : vector<8x8x1xf32> to vector<8x8x8xf32>
    %14 = arith.subf %6, %13 : vector<8x8x8xf32>
    %15 = math.exp %14 : vector<8x8x8xf32>
    %c0_13 = arith.constant 0 : index
    %c0_14 = arith.constant 0 : index
    %c0_15 = arith.constant 0 : index
    %16 = vector.load %arg9[%c0_13, %c0_14, %c0_15] : memref<8x8x1xf32, #tpu.memory_space<vmem>>, vector<8x8x1xf32>
    %17 = arith.mulf %12, %16 : vector<8x8x1xf32>
    %cst_16 = arith.constant dense<0.000000e+00> : vector<8x8xf32>
    %18 = vector.multi_reduction <add>, %15, %cst_16 [2] : vector<8x8x8xf32> to vector<8x8xf32>
    %19 = vector.shape_cast %18 : vector<8x8xf32> to vector<8x8x1xf32>
    %20 = arith.addf %17, %19 : vector<8x8x1xf32>
    %c0_17 = arith.constant 0 : index
    %c0_18 = arith.constant 0 : index
    %c0_19 = arith.constant 0 : index
    %21 = vector.load %arg9[%c0_17, %c0_18, %c0_19] : memref<8x8x1xf32, #tpu.memory_space<vmem>>, vector<8x8x1xf32>
    tpu.vector_store %arg9[%c0_17, %c0_18, %c0_19], %20 {strides = array<i32>} : memref<8x8x1xf32, #tpu.memory_space<vmem>>, vector<8x8x1xf32>,
    %c0_20 = arith.constant 0 : index
    %c0_21 = arith.constant 0 : index
    %c0_22 = arith.constant 0 : index
    %22 = vector.load %arg10[%c0_20, %c0_21, %c0_22] : memref<8x8x8xf32, #tpu.memory_space<vmem>>, vector<8x8x8xf32>
    %23 = vector.broadcast %12 : vector<8x8x1xf32> to vector<8x8x8xf32>
    %24 = arith.mulf %23, %22 : vector<8x8x8xf32>
    "tpu.trace_start"() <{level = 10 : i32, message = "gqk,gkd->gqd"}> : () -> ()
    %cst_23 = arith.constant dense<0.000000e+00> : vector<8x8x8xf32>
    %25 = tpu.matmul %15, %5, %cst_23 {dimension_numbers = #tpu.dot_dimension_numbers<[2], [1], [1], [2], [0, 0, 0, 1, 1, 2], [0], [0]>} : vector<8x8x8xf32>, vector<8x8x8xf32>, vector<8x8x8xf32> -> vector<8x8x8xf32>
    "tpu.trace_stop"() : () -> ()
    %26 = arith.addf %24, %25 : vector<8x8x8xf32>
    %c0_24 = arith.constant 0 : index
    %c0_25 = arith.constant 0 : index
    %c0_26 = arith.constant 0 : index
    %27 = vector.load %arg10[%c0_24, %c0_25, %c0_26] : memref<8x8x8xf32, #tpu.memory_space<vmem>>, vector<8x8x8xf32>
    tpu.vector_store %arg10[%c0_24, %c0_25, %c0_26], %26 {strides = array<i32>} : memref<8x8x8xf32, #tpu.memory_space<vmem>>, vector<8x8x8xf32>,
    %c0_27 = arith.constant 0 : index
    %c0_28 = arith.constant 0 : index
    %c0_29 = arith.constant 0 : index
    %28 = vector.load %arg8[%c0_27, %c0_28, %c0_29] : memref<8x8x1xf32, #tpu.memory_space<vmem>>, vector<8x8x1xf32>
    tpu.vector_store %arg8[%c0_27, %c0_28, %c0_29], %10 {strides = array<i32>} : memref<8x8x1xf32, #tpu.memory_space<vmem>>, vector<8x8x1xf32>,
    %c0_i32_30 = arith.constant 0 : i32
    %29 = arith.cmpi eq, %arg2, %c0_i32_30 : i32
    %30 = arith.extui %29 : i1 to i32
    %c0_i32_31 = arith.constant 0 : i32
    %31 = arith.cmpi ne, %30, %c0_i32_31 : i32
    scf.if %31 {
      %c0_32 = arith.constant 0 : index
      %c0_33 = arith.constant 0 : index
      %c0_34 = arith.constant 0 : index
      %32 = vector.load %arg9[%c0_32, %c0_33, %c0_34] : memref<8x8x1xf32, #tpu.memory_space<vmem>>, vector<8x8x1xf32>
      %33 = tpu.reciprocal %32 {approx = true} : vector<8x8x1xf32> -> vector<8x8x1xf32>
      %c0_35 = arith.constant 0 : index
      %c0_36 = arith.constant 0 : index
      %c0_37 = arith.constant 0 : index
      %34 = vector.load %arg10[%c0_35, %c0_36, %c0_37] : memref<8x8x8xf32, #tpu.memory_space<vmem>>, vector<8x8x8xf32>
      %35 = vector.broadcast %33 : vector<8x8x1xf32> to vector<8x8x8xf32>
      %36 = arith.mulf %34, %35 : vector<8x8x8xf32>
      %c0_38 = arith.constant 0 : index
      %c0_39 = arith.constant 0 : index
      %c0_40 = arith.constant 0 : index
      %37 = vector.load %arg6[%c0_38, %c0_39, %c0_40] : memref<8x8x8xf32, #tpu.memory_space<vmem>>, vector<8x8x8xf32>
      tpu.vector_store %arg6[%c0_38, %c0_39, %c0_40], %36 {strides = array<i32>} : memref<8x8x8xf32, #tpu.memory_space<vmem>>, vector<8x8x8xf32>,
    } else {
    }
    return
  }
  func.func @transform_0(%arg0: i32, %arg1: i32, %arg2: i32) -> (i32, i32, i32) {
    %c0_i32 = arith.constant 0 : i32
    %c0_i32_0 = arith.constant 0 : i32
    return %arg0, %arg1, %c0_i32 : i32, i32, i32
  }
  func.func @transform_1(%arg0: i32, %arg1: i32, %arg2: i32) -> (i32, i32, i32) {
    %c0_i32 = arith.constant 0 : i32
    %c0_i32_0 = arith.constant 0 : i32
    return %arg0, %arg2, %c0_i32 : i32, i32, i32
  }
  func.func @transform_2(%arg0: i32, %arg1: i32, %arg2: i32) -> (i32, i32, i32) {
    %c0_i32 = arith.constant 0 : i32
    %c0_i32_0 = arith.constant 0 : i32
    return %arg0, %arg2, %c0_i32 : i32, i32, i32
  }
  func.func @transform_3(%arg0: i32, %arg1: i32, %arg2: i32) -> (i32, i32, i32) {
    %c0_i32 = arith.constant 0 : i32
    %c0_i32_0 = arith.constant 0 : i32
    return %arg0, %arg1, %c0_i32 : i32, i32, i32
  }
}

</mosaic_0001>

<llo_original>
// kernel: attention_forward.7
$region0: #{attention_forward.7}
  #allocation0 [shape = 'u32[]', space=smem, size = 0x4, offset = 0x4, fixed_abs, tag = 'smem constant byte address 0x4 - core index']
  #allocation1 [shape = 'u32[72,128]{1,0:T(1,128)}', space=vmem, size = 0x9000, scoped, tag = 'internal scratch']
  #allocation2 [shape = 'f32[16,32]{1,0:T(8,128)}', space=vmem, size = 0x2000, scoped, tag = 'scratch operand']
  %s0 = inlined_call_operand.hbm [shape: f32[16,32], index: 0, kind: input, shape index: {}]
  %s1 = inlined_call_operand.hbm [shape: f32[32,32], index: 1, kind: input, shape index: {}]
  %s2 = inlined_call_operand.vmem [shape: f32[1,32], index: 2, kind: input, shape index: {}]
  %s3 = inlined_call_operand.vmem [shape: f32[16,32], index: 3, kind: output, shape index: {}]
  %s4 = sld [smem:[#allocation0]]
  $region38: #{attention_forward.7} parent=0
    _
  %s6 = ssub.s32 1, %s4
  %s7 = scalar_select 0, %s6, %s4
  $region1: #{attention_forward.7} parent=0
    #allocation3 [shape = 'u8[8192]{0}', space=vmem, size = 0x2000, scoped, tag = 'input window, operand 0, single buffered']
    #allocation4 [shape = 's32[1]{0}', space=sflag, size = 0x4, scoped, tag = 'scoped memory for attention_forward.7']
    #allocation5 [shape = 'u8[16384]{0}', space=vmem, size = 0x4000, scoped, tag = 'input window, operand 1, single buffered']
    #allocation6 [shape = 's32[1]{0}', space=sflag, size = 0x4, scoped, tag = 'scoped memory for attention_forward.7']
    %8 = vsyncpa [#allocation4], 0
    %9 = vsyncpa [#allocation6], 0
    // Predicated region
    $region2: #{attention_forward.7} parent=1 // pred_check
      _
    $region3: #{attention_forward.7} parent=1 // pred_check_branch
      %11 = sbr.rel (0) target = $region5
    $region4: #{attention_forward.7} parent=1 // pred_region
      %13 = vsyncadd [#allocation4], 0
      %s14 = sshll.u32 %s0, 4
      %s15 = int_to_ptr.hbm [resolvable:$true] %s14
      %s16 = sshll.u32 [#allocation3], 4
      %s17 = int_to_ptr.vmem [resolvable:$true] %s16
      %22 = dma.hbm_to_vmem [thread:$0]  %s15, 256, %s17, [#allocation4], 128, 128, 8
    $region5: #{attention_forward.7} parent=1 // pred_fallthru
      _
    // Predicated region
    $region6: #{attention_forward.7} parent=1 // pred_check
      _
    $region7: #{attention_forward.7} parent=1 // pred_check_branch
      %24 = sbr.rel (0) target = $region9
    $region8: #{attention_forward.7} parent=1 // pred_region
      %26 = vsyncadd [#allocation6], 0
      %s27 = sshll.u32 %s1, 4
      %s28 = int_to_ptr.hbm [resolvable:$true] %s27
      %s29 = sshll.u32 [#allocation5], 4
      %s30 = int_to_ptr.vmem [resolvable:$true] %s29
      %35 = dma.hbm_to_vmem [thread:$0]  %s28, 512, %s30, [#allocation6], 128, 128, 8
    $region9: #{attention_forward.7} parent=1 // pred_fallthru
      _
    // Predicated region
    $region10: #{attention_forward.7} parent=1 // pred_check
      _
    $region11: #{attention_forward.7} parent=1 // pred_check_branch
      %37 = sbr.rel (0) target = $region13
    $region12: #{attention_forward.7} parent=1 // pred_region
      _
    $region13: #{attention_forward.7} parent=1 // pred_fallthru
      _
    // Predicated region
    $region14: #{attention_forward.7} parent=1 // pred_check
      _
    $region15: #{attention_forward.7} parent=1 // pred_check_branch
      %39 = sbr.rel (0) target = $region17
    $region16: #{attention_forward.7} parent=1 // pred_region
      %41 = dma.done [#allocation4], 256
    $region17: #{attention_forward.7} parent=1 // pred_fallthru
      _
    // Predicated region
    $region18: #{attention_forward.7} parent=1 // pred_check
      _
    $region19: #{attention_forward.7} parent=1 // pred_check_branch
      %43 = sbr.rel (0) target = $region21
    $region20: #{attention_forward.7} parent=1 // pred_region
      %45 = dma.done [#allocation6], 512
    $region21: #{attention_forward.7} parent=1 // pred_fallthru
      _
    %p46 = scmp.eq.s32.totalorder 0, 0
    // Predicated region
    $region22: #{attention_forward.7} parent=1 // pred_check
      %p47 = pneg %p46
    $region23: #{attention_forward.7} parent=1 // pred_check_branch
      %49 = sbr.rel (%p47) target = $region25
    $region24: #{attention_forward.7} parent=1 // pred_region
      %vm50 = vcmask 261120
      %51 = vst.msk [vmem:[#allocation2] sm:$0xff] %vm50, 0.0
      %52 = vst.msk [vmem:[#allocation2 + $0x8] sm:$0xff] %vm50, 0.0
    $region25: #{attention_forward.7} parent=1 // pred_fallthru
      _
    %v53 = vld [vmem:[#allocation2] sm:$0xff]
    %v54 = vld [vmem:[#allocation2 + $0x8] sm:$0xff]
    %v55 = vld [vmem:[#allocation3] sm:$0xff]
    %v56 = vld [vmem:[#allocation3 + $0x8] sm:$0xff]
    %v57 = vld [vmem:[#allocation5] sm:$0xff]
    %v58 = vld [vmem:[#allocation5 + $0x8] sm:$0xff]
    %v59 = vld [vmem:[#allocation5 + $0x10] sm:$0xff]
    %v60 = vld [vmem:[#allocation5 + $0x18] sm:$0xff]
    %vm61 = vcmask 261120
    %v63 = vsel %vm61, %v55, 0
    %v66 = vsel %vm61, %v56, 0
    %68 = vmatpush.msra.mxu0 0.0
    %69 = vmatpush.msra.mxu0 0.0
    %70 = vmatpush.msra.mxu0 0.0
    %71 = vmatpush.msra.mxu0 0.0
    %72 = vmatpush.msra.mxu0 0.0
    %73 = vmatpush.msra.mxu0 0.0
    %74 = vmatpush.msra.mxu0 0.0
    %75 = vmatpush.msra.mxu0 0.0
    %76 = vmatpush.msra.mxu0 0.0
    %77 = vmatpush.msra.mxu0 0.0
    %78 = vmatpush.msra.mxu0 0.0
    %79 = vmatpush.msra.mxu0 0.0
    %80 = vmatpush.msra.mxu0 %v60
    %81 = vmatpush.msra.mxu0 %v59
    %82 = vmatpush.msra.mxu0 %v58
    %83 = vmatpush.msra.mxu0 %v57
    %84 = vmatmul.f32.gmra.mxu0 %v63
    %v85 = vpop.f32.mrf.mxu0
    %v86 = vadd.f32 0.0, %v85
    %87 = vmatmul.f32.gmra.mxu0 %v66
    %v88 = vpop.f32.mrf.mxu0
    %v89 = vadd.f32 0.0, %v88
    %90 = vdwg.mxu0
    %v91 = vadd.f32 %v53, %v86
    %v92 = vadd.f32 %v54, %v89
    %93 = vst.msk [vmem:[#allocation2] sm:$0xff] %vm61, %v91
    %94 = vst.msk [vmem:[#allocation2 + $0x8] sm:$0xff] %vm61, %v92
    // Predicated region
    $region26: #{attention_forward.7} parent=1 // pred_check
      %p95 = pneg %p46
    $region27: #{attention_forward.7} parent=1 // pred_check_branch
      %97 = sbr.rel (%p95) target = $region29
    $region28: #{attention_forward.7} parent=1 // pred_region
      %v98 = vld [vmem:[#allocation2] sm:$0xff]
      %v99 = vld [vmem:[#allocation2 + $0x8] sm:$0xff]
      %v100 = vld [vmem:[%s2] sm:$0x1]
      %v102 = vperm.slane %v100, 0
      %v104 = vadd.f32 %v98, %v102
      %v105 = vadd.f32 %v99, %v102
      %106 = vst.msk [vmem:[%s3] sm:$0xff] %vm61, %v104
      %107 = vst.msk [vmem:[%s3 + $0x8] sm:$0xff] %vm61, %v105
    $region29: #{attention_forward.7} parent=1 // pred_fallthru
      _
    // Predicated region
    $region30: #{attention_forward.7} parent=1 // pred_check
      _
    $region31: #{attention_forward.7} parent=1 // pred_check_branch
      %109 = sbr.rel (0) target = $region33
    $region32: #{attention_forward.7} parent=1 // pred_region
      _
    $region33: #{attention_forward.7} parent=1 // pred_fallthru
      _
    // Predicated region
    $region34: #{attention_forward.7} parent=1 // pred_check
      _
    $region35: #{attention_forward.7} parent=1 // pred_check_branch
      %111 = sbr.rel (0) target = $region37
    $region36: #{attention_forward.7} parent=1 // pred_region
      _
    $region37: #{attention_forward.7} parent=1 // pred_fallthru
      _
    %112 = vsyncpa [#allocation4], 1
    %113 = vsyncpa [#allocation6], 1

// kernel: attention_forward.9
$region0: #{attention_forward.9}
  #allocation0 [shape = 'u32[]', space=smem, size = 0x4, offset = 0x4, fixed_abs, tag = 'smem constant byte address 0x4 - core index']
  #allocation1 [shape = 'u32[72,128]{1,0:T(1,128)}', space=vmem, size = 0x9000, scoped, tag = 'internal scratch']
  #allocation2 [shape = 'f32[16,32]{1,0:T(8,128)}', space=vmem, size = 0x2000, scoped, tag = 'scratch operand']
  %s0 = inlined_call_operand.vmem [shape: f32[16,32], index: 0, kind: input, shape index: {}]
  %s1 = inlined_call_operand.vmem [shape: f32[32,32], index: 1, kind: input, shape index: {}]
  %s2 = inlined_call_operand.vmem [shape: f32[1,32], index: 2, kind: input, shape index: {}]
  %s3 = inlined_call_operand.hbm [shape: f32[16,32], index: 3, kind: output, shape index: {}]
  %s4 = sld [smem:[#allocation0]]
  $region30: #{attention_forward.9} parent=0
    _
  %s6 = ssub.s32 1, %s4
  %s7 = scalar_select 0, %s6, %s4
  $region1: #{attention_forward.9} parent=0
    #allocation3 [shape = 'u8[8192]{0}', space=vmem, size = 0x2000, scoped, tag = 'output window, operand 0, single buffered']
    #allocation4 [shape = 's32[1]{0}', space=sflag, size = 0x4, scoped, tag = 'scoped memory for attention_forward.9']
    %8 = vsyncpa [#allocation4], 0
    // Predicated region
    $region2: #{attention_forward.9} parent=1 // pred_check
      _
    $region3: #{attention_forward.9} parent=1 // pred_check_branch
      %10 = sbr.rel (0) target = $region5
    $region4: #{attention_forward.9} parent=1 // pred_region
      _
    $region5: #{attention_forward.9} parent=1 // pred_fallthru
      _
    // Predicated region
    $region6: #{attention_forward.9} parent=1 // pred_check
      _
    $region7: #{attention_forward.9} parent=1 // pred_check_branch
      %12 = sbr.rel (0) target = $region9
    $region8: #{attention_forward.9} parent=1 // pred_region
      _
    $region9: #{attention_forward.9} parent=1 // pred_fallthru
      _
    // Predicated region
    $region10: #{attention_forward.9} parent=1 // pred_check
      _
    $region11: #{attention_forward.9} parent=1 // pred_check_branch
      %14 = sbr.rel (0) target = $region13
    $region12: #{attention_forward.9} parent=1 // pred_region
      _
    $region13: #{attention_forward.9} parent=1 // pred_fallthru
      _
    %p15 = scmp.eq.s32.totalorder 0, 0
    // Predicated region
    $region14: #{attention_forward.9} parent=1 // pred_check
      %p16 = pneg %p15
    $region15: #{attention_forward.9} parent=1 // pred_check_branch
      %18 = sbr.rel (%p16) target = $region17
    $region16: #{attention_forward.9} parent=1 // pred_region
      %vm19 = vcmask 261120
      %20 = vst.msk [vmem:[#allocation2] sm:$0xff] %vm19, 0.0
      %21 = vst.msk [vmem:[#allocation2 + $0x8] sm:$0xff] %vm19, 0.0
    $region17: #{attention_forward.9} parent=1 // pred_fallthru
      _
    %v22 = vld [vmem:[#allocation2] sm:$0xff]
    %v23 = vld [vmem:[#allocation2 + $0x8] sm:$0xff]
    %v24 = vld [vmem:[%s0] sm:$0xff]
    %v25 = vld [vmem:[%s0 + $0x8] sm:$0xff]
    %v26 = vld [vmem:[%s1] sm:$0xff]
    %v27 = vld [vmem:[%s1 + $0x8] sm:$0xff]
    %v28 = vld [vmem:[%s1 + $0x10] sm:$0xff]
    %v29 = vld [vmem:[%s1 + $0x18] sm:$0xff]
    %vm30 = vcmask 261120
    %v32 = vsel %vm30, %v24, 0
    %v35 = vsel %vm30, %v25, 0
    %37 = vmatpush.msra.mxu0 0.0
    %38 = vmatpush.msra.mxu0 0.0
    %39 = vmatpush.msra.mxu0 0.0
    %40 = vmatpush.msra.mxu0 0.0
    %41 = vmatpush.msra.mxu0 0.0
    %42 = vmatpush.msra.mxu0 0.0
    %43 = vmatpush.msra.mxu0 0.0
    %44 = vmatpush.msra.mxu0 0.0
    %45 = vmatpush.msra.mxu0 0.0
    %46 = vmatpush.msra.mxu0 0.0
    %47 = vmatpush.msra.mxu0 0.0
    %48 = vmatpush.msra.mxu0 0.0
    %49 = vmatpush.msra.mxu0 %v29
    %50 = vmatpush.msra.mxu0 %v28
    %51 = vmatpush.msra.mxu0 %v27
    %52 = vmatpush.msra.mxu0 %v26
    %53 = vmatmul.f32.gmra.mxu0 %v32
    %v54 = vpop.f32.mrf.mxu0
    %v55 = vadd.f32 0.0, %v54
    %56 = vmatmul.f32.gmra.mxu0 %v35
    %v57 = vpop.f32.mrf.mxu0
    %v58 = vadd.f32 0.0, %v57
    %59 = vdwg.mxu0
    %v60 = vadd.f32 %v22, %v55
    %v61 = vadd.f32 %v23, %v58
    %62 = vst.msk [vmem:[#allocation2] sm:$0xff] %vm30, %v60
    %63 = vst.msk [vmem:[#allocation2 + $0x8] sm:$0xff] %vm30, %v61
    // Predicated region
    $region18: #{attention_forward.9} parent=1 // pred_check
      %p64 = pneg %p15
    $region19: #{attention_forward.9} parent=1 // pred_check_branch
      %66 = sbr.rel (%p64) target = $region21
    $region20: #{attention_forward.9} parent=1 // pred_region
      %v67 = vld [vmem:[#allocation2] sm:$0xff]
      %v68 = vld [vmem:[#allocation2 + $0x8] sm:$0xff]
      %v69 = vld [vmem:[%s2] sm:$0x1]
      %v71 = vperm.slane %v69, 0
      %v73 = vadd.f32 %v67, %v71
      %v74 = vadd.f32 %v68, %v71
      %75 = vst.msk [vmem:[#allocation3] sm:$0xff] %vm30, %v73
      %76 = vst.msk [vmem:[#allocation3 + $0x8] sm:$0xff] %vm30, %v74
    $region21: #{attention_forward.9} parent=1 // pred_fallthru
      _
    // Predicated region
    $region22: #{attention_forward.9} parent=1 // pred_check
      _
    $region23: #{attention_forward.9} parent=1 // pred_check_branch
      %78 = sbr.rel (0) target = $region25
    $region24: #{attention_forward.9} parent=1 // pred_region
      %80 = vsyncadd [#allocation4], 0
      %s81 = sshll.u32 [#allocation3], 4
      %s82 = int_to_ptr.vmem [resolvable:$true] %s81
      %s83 = sshll.u32 %s3, 4
      %s84 = int_to_ptr.hbm [resolvable:$true] %s83
      %89 = dma.vmem_to_hbm [thread:$0]  %s82, 256, %s84, [#allocation4], 128, 128, 8
    $region25: #{attention_forward.9} parent=1 // pred_fallthru
      _
    // Predicated region
    $region26: #{attention_forward.9} parent=1 // pred_check
      _
    $region27: #{attention_forward.9} parent=1 // pred_check_branch
      %91 = sbr.rel (0) target = $region29
    $region28: #{attention_forward.9} parent=1 // pred_region
      %93 = dma.done [#allocation4], 256
    $region29: #{attention_forward.9} parent=1 // pred_fallthru
      _
    %94 = vsyncpa [#allocation4], 1

// kernel: attention_forward.8
$region0: #{attention_forward.8}
  #allocation0 [shape = 'u32[]', space=smem, size = 0x4, offset = 0x4, fixed_abs, tag = 'smem constant byte address 0x4 - core index']
  #allocation1 [shape = 'u32[72,128]{1,0:T(1,128)}', space=vmem, size = 0x9000, scoped, tag = 'internal scratch']
  #allocation2 [shape = 'f32[8,8,8]{2,1,0:T(8,128)}', space=vmem, size = 0x8000, scoped, tag = 'scratch operand']
  #allocation3 [shape = 'f32[8,8,1]{2,1,0:T(8,128)}', space=vmem, size = 0x8000, scoped, tag = 'scratch operand']
  #allocation4 [shape = 'f32[8,8,1]{2,1,0:T(8,128)}', space=vmem, size = 0x8000, scoped, tag = 'scratch operand']
  #allocation5 [shape = 'f32[8,8,8]{2,1,0:T(8,128)}', space=vmem, size = 0x8000, scoped, tag = 'scratch operand']
  %s0 = inlined_call_operand.vmem [shape: f32[8,8,8], index: 0, kind: input, shape index: {}]
  %s1 = inlined_call_operand.vmem [shape: f32[8,8,8], index: 1, kind: input, shape index: {}]
  %s2 = inlined_call_operand.vmem [shape: f32[8,8,8], index: 2, kind: input, shape index: {}]
  %s3 = inlined_call_operand.vmem [shape: f32[8,8,8], index: 3, kind: output, shape index: {}]
  %s4 = sld [smem:[#allocation0]]
  $region30: #{attention_forward.8} parent=0
    _
  %s6 = ssub.s32 1, %s4
  %s7 = scalar_select 0, %s6, %s4
  // Predicated region
  $region2: #{attention_forward.8} parent=0 // pred_check
    _
  $region3: #{attention_forward.8} parent=0 // pred_check_branch
    %9 = sbr.rel (0) target = $region5
  $region4: #{attention_forward.8} parent=0 // pred_region
    _
  $region5: #{attention_forward.8} parent=0 // pred_fallthru
    _
  // Predicated region
  $region6: #{attention_forward.8} parent=0 // pred_check
    _
  $region7: #{attention_forward.8} parent=0 // pred_check_branch
    %11 = sbr.rel (0) target = $region9
  $region8: #{attention_forward.8} parent=0 // pred_region
    _
  $region9: #{attention_forward.8} parent=0 // pred_fallthru
    _
  // Predicated region
  $region10: #{attention_forward.8} parent=0 // pred_check
    _
  $region11: #{attention_forward.8} parent=0 // pred_check_branch
    %13 = sbr.rel (0) target = $region13
  $region12: #{attention_forward.8} parent=0 // pred_region
    _
  $region13: #{attention_forward.8} parent=0 // pred_fallthru
    _
  %p14 = scmp.eq.s32.totalorder 0, 0
  // Predicated region
  $region14: #{attention_forward.8} parent=0 // pred_check
    %p15 = pneg %p14
  $region15: #{attention_forward.8} parent=0 // pred_check_branch
    %17 = sbr.rel (%p15) target = $region17
  $region16: #{attention_forward.8} parent=0 // pred_region
    %v18 = vld [vmem:[%s0] sm:$0xff]
    %v19 = vld [vmem:[%s0 + $0x8] sm:$0xff]
    %v20 = vld [vmem:[%s0 + $0x10] sm:$0xff]
    %v21 = vld [vmem:[%s0 + $0x18] sm:$0xff]
    %v22 = vld [vmem:[%s0 + $0x20] sm:$0xff]
    %v23 = vld [vmem:[%s0 + $0x28] sm:$0xff]
    %v24 = vld [vmem:[%s0 + $0x30] sm:$0xff]
    %v25 = vld [vmem:[%s0 + $0x38] sm:$0xff]
    %v26 = vmul.f32 %v18, 0.35355338
    %v27 = vmul.f32 %v19, 0.35355338
    %v28 = vmul.f32 %v20, 0.35355338
    %v29 = vmul.f32 %v21, 0.35355338
    %v30 = vmul.f32 %v22, 0.35355338
    %v31 = vmul.f32 %v23, 0.35355338
    %v32 = vmul.f32 %v24, 0.35355338
    %v33 = vmul.f32 %v25, 0.35355338
    %vm34 = vcmask 64512
    %35 = vst.msk [vmem:[#allocation2] sm:$0xff] %vm34, %v26
    %36 = vst.msk [vmem:[#allocation2 + $0x8] sm:$0xff] %vm34, %v27
    %37 = vst.msk [vmem:[#allocation2 + $0x10] sm:$0xff] %vm34, %v28
    %38 = vst.msk [vmem:[#allocation2 + $0x18] sm:$0xff] %vm34, %v29
    %39 = vst.msk [vmem:[#allocation2 + $0x20] sm:$0xff] %vm34, %v30
    %40 = vst.msk [vmem:[#allocation2 + $0x28] sm:$0xff] %vm34, %v31
    %41 = vst.msk [vmem:[#allocation2 + $0x30] sm:$0xff] %vm34, %v32
    %42 = vst.msk [vmem:[#allocation2 + $0x38] sm:$0xff] %vm34, %v33
    %vm43 = vcmask 7168
    %44 = vst.msk [vmem:[#allocation3] sm:$0xff] %vm43, -inf
    %45 = vst.msk [vmem:[#allocation3 + $0x8] sm:$0xff] %vm43, -inf
    %46 = vst.msk [vmem:[#allocation3 + $0x10] sm:$0xff] %vm43, -inf
    %47 = vst.msk [vmem:[#allocation3 + $0x18] sm:$0xff] %vm43, -inf
    %48 = vst.msk [vmem:[#allocation3 + $0x20] sm:$0xff] %vm43, -inf
    %49 = vst.msk [vmem:[#allocation3 + $0x28] sm:$0xff] %vm43, -inf
    %50 = vst.msk [vmem:[#allocation3 + $0x30] sm:$0xff] %vm43, -inf
    %51 = vst.msk [vmem:[#allocation3 + $0x38] sm:$0xff] %vm43, -inf
    %52 = vst.msk [vmem:[#allocation4] sm:$0xff] %vm43, 0.0
    %53 = vst.msk [vmem:[#allocation4 + $0x8] sm:$0xff] %vm43, 0.0
    %54 = vst.msk [vmem:[#allocation4 + $0x10] sm:$0xff] %vm43, 0.0
    %55 = vst.msk [vmem:[#allocation4 + $0x18] sm:$0xff] %vm43, 0.0
    %56 = vst.msk [vmem:[#allocation4 + $0x20] sm:$0xff] %vm43, 0.0
    %57 = vst.msk [vmem:[#allocation4 + $0x28] sm:$0xff] %vm43, 0.0
    %58 = vst.msk [vmem:[#allocation4 + $0x30] sm:$0xff] %vm43, 0.0
    %59 = vst.msk [vmem:[#allocation4 + $0x38] sm:$0xff] %vm43, 0.0
    %60 = vst.msk [vmem:[#allocation5] sm:$0xff] %vm34, 0.0
    %61 = vst.msk [vmem:[#allocation5 + $0x8] sm:$0xff] %vm34, 0.0
    %62 = vst.msk [vmem:[#allocation5 + $0x10] sm:$0xff] %vm34, 0.0
    %63 = vst.msk [vmem:[#allocation5 + $0x18] sm:$0xff] %vm34, 0.0
    %64 = vst.msk [vmem:[#allocation5 + $0x20] sm:$0xff] %vm34, 0.0
    %65 = vst.msk [vmem:[#allocation5 + $0x28] sm:$0xff] %vm34, 0.0
    %66 = vst.msk [vmem:[#allocation5 + $0x30] sm:$0xff] %vm34, 0.0
    %67 = vst.msk [vmem:[#allocation5 + $0x38] sm:$0xff] %vm34, 0.0
  $region17: #{attention_forward.8} parent=0 // pred_fallthru
    _
  %v68 = vld [vmem:[#allocation2] sm:$0xff]
  %v69 = vld [vmem:[#allocation2 + $0x8] sm:$0xff]
  %v70 = vld [vmem:[#allocation2 + $0x10] sm:$0xff]
  %v71 = vld [vmem:[#allocation2 + $0x18] sm:$0xff]
  %v72 = vld [vmem:[#allocation2 + $0x20] sm:$0xff]
  %v73 = vld [vmem:[#allocation2 + $0x28] sm:$0xff]
  %v74 = vld [vmem:[#allocation2 + $0x30] sm:$0xff]
  %v75 = vld [vmem:[#allocation2 + $0x38] sm:$0xff]
  %v76 = vld [vmem:[%s1] sm:$0xff]
  %v77 = vld [vmem:[%s1 + $0x8] sm:$0xff]
  %v78 = vld [vmem:[%s1 + $0x10] sm:$0xff]
  %v79 = vld [vmem:[%s1 + $0x18] sm:$0xff]
  %v80 = vld [vmem:[%s1 + $0x20] sm:$0xff]
  %v81 = vld [vmem:[%s1 + $0x28] sm:$0xff]
  %v82 = vld [vmem:[%s1 + $0x30] sm:$0xff]
  %v83 = vld [vmem:[%s1 + $0x38] sm:$0xff]
  %v84 = vld [vmem:[%s2] sm:$0xff]
  %v85 = vld [vmem:[%s2 + $0x8] sm:$0xff]
  %v86 = vld [vmem:[%s2 + $0x10] sm:$0xff]
  %v87 = vld [vmem:[%s2 + $0x18] sm:$0xff]
  %v88 = vld [vmem:[%s2 + $0x20] sm:$0xff]
  %v89 = vld [vmem:[%s2 + $0x28] sm:$0xff]
  %v90 = vld [vmem:[%s2 + $0x30] sm:$0xff]
  %v91 = vld [vmem:[%s2 + $0x38] sm:$0xff]
  %vm92 = vcmask 64512
  %v94 = vsel %vm92, %v68, 0
  %v97 = vsel %vm92, %v76, 0
  %99 = vmatpush.xpose.msra.mxu0 0.0
  %100 = vmatpush.xpose.msra.mxu0 0.0
  %101 = vmatpush.xpose.msra.mxu0 0.0
  %102 = vmatpush.xpose.msra.mxu0 0.0
  %103 = vmatpush.xpose.msra.mxu0 0.0
  %104 = vmatpush.xpose.msra.mxu0 0.0
  %105 = vmatpush.xpose.msra.mxu0 0.0
  %106 = vmatpush.xpose.msra.mxu0 0.0
  %107 = vmatpush.xpose.msra.mxu0 0.0
  %108 = vmatpush.xpose.msra.mxu0 0.0
  %109 = vmatpush.xpose.msra.mxu0 0.0
  %110 = vmatpush.xpose.msra.mxu0 0.0
  %111 = vmatpush.xpose.msra.mxu0 0.0
  %112 = vmatpush.xpose.msra.mxu0 0.0
  %113 = vmatpush.xpose.msra.mxu0 0.0
  %114 = vmatpush.xpose.msra.mxu0 %v97
  %115 = vmatmul.f32.gmra.mxu0 %v94
  %v116 = vpop.f32.mrf.mxu0
  %v117 = vadd.f32 0.0, %v116
  %118 = vdwg.mxu0
  %v120 = vsel %vm92, %v69, 0
  %v123 = vsel %vm92, %v77, 0
  %125 = vmatpush.xpose.msra.mxu0 0.0
  %126 = vmatpush.xpose.msra.mxu0 0.0
  %127 = vmatpush.xpose.msra.mxu0 0.0
  %128 = vmatpush.xpose.msra.mxu0 0.0
  %129 = vmatpush.xpose.msra.mxu0 0.0
  %130 = vmatpush.xpose.msra.mxu0 0.0
  %131 = vmatpush.xpose.msra.mxu0 0.0
  %132 = vmatpush.xpose.msra.mxu0 0.0
  %133 = vmatpush.xpose.msra.mxu0 0.0
  %134 = vmatpush.xpose.msra.mxu0 0.0
  %135 = vmatpush.xpose.msra.mxu0 0.0
  %136 = vmatpush.xpose.msra.mxu0 0.0
  %137 = vmatpush.xpose.msra.mxu0 0.0
  %138 = vmatpush.xpose.msra.mxu0 0.0
  %139 = vmatpush.xpose.msra.mxu0 0.0
  %140 = vmatpush.xpose.msra.mxu0 %v123
  %141 = vmatmul.f32.gmra.mxu0 %v120
  %v142 = vpop.f32.mrf.mxu0
  %v143 = vadd.f32 0.0, %v142
  %144 = vdwg.mxu0
  %v146 = vsel %vm92, %v70, 0
  %v149 = vsel %vm92, %v78, 0
  %151 = vmatpush.xpose.msra.mxu0 0.0
  %152 = vmatpush.xpose.msra.mxu0 0.0
  %153 = vmatpush.xpose.msra.mxu0 0.0
  %154 = vmatpush.xpose.msra.mxu0 0.0
  %155 = vmatpush.xpose.msra.mxu0 0.0
  %156 = vmatpush.xpose.msra.mxu0 0.0
  %157 = vmatpush.xpose.msra.mxu0 0.0
  %158 = vmatpush.xpose.msra.mxu0 0.0
  %159 = vmatpush.xpose.msra.mxu0 0.0
  %160 = vmatpush.xpose.msra.mxu0 0.0
  %161 = vmatpush.xpose.msra.mxu0 0.0
  %162 = vmatpush.xpose.msra.mxu0 0.0
  %163 = vmatpush.xpose.msra.mxu0 0.0
  %164 = vmatpush.xpose.msra.mxu0 0.0
  %165 = vmatpush.xpose.msra.mxu0 0.0
  %166 = vmatpush.xpose.msra.mxu0 %v149
  %167 = vmatmul.f32.gmra.mxu0 %v146
  %v168 = vpop.f32.mrf.mxu0
  %v169 = vadd.f32 0.0, %v168
  %170 = vdwg.mxu0
  %v172 = vsel %vm92, %v71, 0
  %v175 = vsel %vm92, %v79, 0
  %177 = vmatpush.xpose.msra.mxu0 0.0
  %178 = vmatpush.xpose.msra.mxu0 0.0
  %179 = vmatpush.xpose.msra.mxu0 0.0
  %180 = vmatpush.xpose.msra.mxu0 0.0
  %181 = vmatpush.xpose.msra.mxu0 0.0
  %182 = vmatpush.xpose.msra.mxu0 0.0
  %183 = vmatpush.xpose.msra.mxu0 0.0
  %184 = vmatpush.xpose.msra.mxu0 0.0
  %185 = vmatpush.xpose.msra.mxu0 0.0
  %186 = vmatpush.xpose.msra.mxu0 0.0
  %187 = vmatpush.xpose.msra.mxu0 0.0
  %188 = vmatpush.xpose.msra.mxu0 0.0
  %189 = vmatpush.xpose.msra.mxu0 0.0
  %190 = vmatpush.xpose.msra.mxu0 0.0
  %191 = vmatpush.xpose.msra.mxu0 0.0
  %192 = vmatpush.xpose.msra.mxu0 %v175
  %193 = vmatmul.f32.gmra.mxu0 %v172
  %v194 = vpop.f32.mrf.mxu0
  %v195 = vadd.f32 0.0, %v194
  %196 = vdwg.mxu0
  %v198 = vsel %vm92, %v72, 0
  %v201 = vsel %vm92, %v80, 0
  %203 = vmatpush.xpose.msra.mxu0 0.0
  %204 = vmatpush.xpose.msra.mxu0 0.0
  %205 = vmatpush.xpose.msra.mxu0 0.0
  %206 = vmatpush.xpose.msra.mxu0 0.0
  %207 = vmatpush.xpose.msra.mxu0 0.0
  %208 = vmatpush.xpose.msra.mxu0 0.0
  %209 = vmatpush.xpose.msra.mxu0 0.0
  %210 = vmatpush.xpose.msra.mxu0 0.0
  %211 = vmatpush.xpose.msra.mxu0 0.0
  %212 = vmatpush.xpose.msra.mxu0 0.0
  %213 = vmatpush.xpose.msra.mxu0 0.0
  %214 = vmatpush.xpose.msra.mxu0 0.0
  %215 = vmatpush.xpose.msra.mxu0 0.0
  %216 = vmatpush.xpose.msra.mxu0 0.0
  %217 = vmatpush.xpose.msra.mxu0 0.0
  %218 = vmatpush.xpose.msra.mxu0 %v201
  %219 = vmatmul.f32.gmra.mxu0 %v198
  %v220 = vpop.f32.mrf.mxu0
  %v221 = vadd.f32 0.0, %v220
  %222 = vdwg.mxu0
  %v224 = vsel %vm92, %v73, 0
  %v227 = vsel %vm92, %v81, 0
  %229 = vmatpush.xpose.msra.mxu0 0.0
  %230 = vmatpush.xpose.msra.mxu0 0.0
  %231 = vmatpush.xpose.msra.mxu0 0.0
  %232 = vmatpush.xpose.msra.mxu0 0.0
  %233 = vmatpush.xpose.msra.mxu0 0.0
  %234 = vmatpush.xpose.msra.mxu0 0.0
  %235 = vmatpush.xpose.msra.mxu0 0.0
  %236 = vmatpush.xpose.msra.mxu0 0.0
  %237 = vmatpush.xpose.msra.mxu0 0.0
  %238 = vmatpush.xpose.msra.mxu0 0.0
  %239 = vmatpush.xpose.msra.mxu0 0.0
  %240 = vmatpush.xpose.msra.mxu0 0.0
  %241 = vmatpush.xpose.msra.mxu0 0.0
  %242 = vmatpush.xpose.msra.mxu0 0.0
  %243 = vmatpush.xpose.msra.mxu0 0.0
  %244 = vmatpush.xpose.msra.mxu0 %v227
  %245 = vmatmul.f32.gmra.mxu0 %v224
  %v246 = vpop.f32.mrf.mxu0
  %v247 = vadd.f32 0.0, %v246
  %248 = vdwg.mxu0
  %v250 = vsel %vm92, %v74, 0
  %v253 = vsel %vm92, %v82, 0
  %255 = vmatpush.xpose.msra.mxu0 0.0
  %256 = vmatpush.xpose.msra.mxu0 0.0
  %257 = vmatpush.xpose.msra.mxu0 0.0
  %258 = vmatpush.xpose.msra.mxu0 0.0
  %259 = vmatpush.xpose.msra.mxu0 0.0
  %260 = vmatpush.xpose.msra.mxu0 0.0
  %261 = vmatpush.xpose.msra.mxu0 0.0
  %262 = vmatpush.xpose.msra.mxu0 0.0
  %263 = vmatpush.xpose.msra.mxu0 0.0
  %264 = vmatpush.xpose.msra.mxu0 0.0
  %265 = vmatpush.xpose.msra.mxu0 0.0
  %266 = vmatpush.xpose.msra.mxu0 0.0
  %267 = vmatpush.xpose.msra.mxu0 0.0
  %268 = vmatpush.xpose.msra.mxu0 0.0
  %269 = vmatpush.xpose.msra.mxu0 0.0
  %270 = vmatpush.xpose.msra.mxu0 %v253
  %271 = vmatmul.f32.gmra.mxu0 %v250
  %v272 = vpop.f32.mrf.mxu0
  %v273 = vadd.f32 0.0, %v272
  %274 = vdwg.mxu0
  %v276 = vsel %vm92, %v75, 0
  %v279 = vsel %vm92, %v83, 0
  %281 = vmatpush.xpose.msra.mxu0 0.0
  %282 = vmatpush.xpose.msra.mxu0 0.0
  %283 = vmatpush.xpose.msra.mxu0 0.0
  %284 = vmatpush.xpose.msra.mxu0 0.0
  %285 = vmatpush.xpose.msra.mxu0 0.0
  %286 = vmatpush.xpose.msra.mxu0 0.0
  %287 = vmatpush.xpose.msra.mxu0 0.0
  %288 = vmatpush.xpose.msra.mxu0 0.0
  %289 = vmatpush.xpose.msra.mxu0 0.0
  %290 = vmatpush.xpose.msra.mxu0 0.0
  %291 = vmatpush.xpose.msra.mxu0 0.0
  %292 = vmatpush.xpose.msra.mxu0 0.0
  %293 = vmatpush.xpose.msra.mxu0 0.0
  %294 = vmatpush.xpose.msra.mxu0 0.0
  %295 = vmatpush.xpose.msra.mxu0 0.0
  %296 = vmatpush.xpose.msra.mxu0 %v279
  %297 = vmatmul.f32.gmra.mxu0 %v276
  %v298 = vpop.f32.mrf.mxu0
  %v299 = vadd.f32 0.0, %v298
  %300 = vdwg.mxu0
  %v301 = vld [vmem:[#allocation3] sm:$0xff]
  %v302 = vld [vmem:[#allocation3 + $0x8] sm:$0xff]
  %v303 = vld [vmem:[#allocation3 + $0x10] sm:$0xff]
  %v304 = vld [vmem:[#allocation3 + $0x18] sm:$0xff]
  %v305 = vld [vmem:[#allocation3 + $0x20] sm:$0xff]
  %v306 = vld [vmem:[#allocation3 + $0x28] sm:$0xff]
  %v307 = vld [vmem:[#allocation3 + $0x30] sm:$0xff]
  %v308 = vld [vmem:[#allocation3 + $0x38] sm:$0xff]
  %v309 = vsel %vm92, %v117, -inf
  %310 = vmax.xlane.f32.xlu0 %v309
  %v311 = vpop.xlane.xlu0 %310
  %v312 = vsel %vm92, %v143, -inf
  %313 = vmax.xlane.f32.xlu0 %v312
  %v314 = vpop.xlane.xlu0 %313
  %v315 = vsel %vm92, %v169, -inf
  %316 = vmax.xlane.f32.xlu0 %v315
  %v317 = vpop.xlane.xlu0 %316
  %v318 = vsel %vm92, %v195, -inf
  %319 = vmax.xlane.f32.xlu0 %v318
  %v320 = vpop.xlane.xlu0 %319
  %v321 = vsel %vm92, %v221, -inf
  %322 = vmax.xlane.f32.xlu0 %v321
  %v323 = vpop.xlane.xlu0 %322
  %v324 = vsel %vm92, %v247, -inf
  %325 = vmax.xlane.f32.xlu0 %v324
  %v326 = vpop.xlane.xlu0 %325
  %v327 = vsel %vm92, %v273, -inf
  %328 = vmax.xlane.f32.xlu0 %v327
  %v329 = vpop.xlane.xlu0 %328
  %v330 = vsel %vm92, %v299, -inf
  %331 = vmax.xlane.f32.xlu0 %v330
  %v332 = vpop.xlane.xlu0 %331
  %v333 = vmax.f32 %v301, %v311
  %v334 = vmax.f32 %v302, %v314
  %v335 = vmax.f32 %v303, %v317
  %v336 = vmax.f32 %v304, %v320
  %v337 = vmax.f32 %v305, %v323
  %v338 = vmax.f32 %v306, %v326
  %v339 = vmax.f32 %v307, %v329
  %v340 = vmax.f32 %v308, %v332
  %v341 = vsub.f32 %v301, %v333
  %v342 = vsub.f32 %v302, %v334
  %v343 = vsub.f32 %v303, %v335
  %v344 = vsub.f32 %v304, %v336
  %v345 = vsub.f32 %v305, %v337
  %v346 = vsub.f32 %v306, %v338
  %v347 = vsub.f32 %v307, %v339
  %v348 = vsub.f32 %v308, %v340
  %v349 = vmul.f32 %v341, 1.442695
  %v350 = vpow.pop %v349
  %v351 = vmul.f32 %v342, 1.442695
  %v352 = vpow.pop %v351
  %v353 = vmul.f32 %v343, 1.442695
  %v354 = vpow.pop %v353
  %v355 = vmul.f32 %v344, 1.442695
  %v356 = vpow.pop %v355
  %v357 = vmul.f32 %v345, 1.442695
  %v358 = vpow.pop %v357
  %v359 = vmul.f32 %v346, 1.442695
  %v360 = vpow.pop %v359
  %v361 = vmul.f32 %v347, 1.442695
  %v362 = vpow.pop %v361
  %v363 = vmul.f32 %v348, 1.442695
  %v364 = vpow.pop %v363
  %366 = vset.pattern.permute.xlu0 0
  %367 = vperm.xlu0 %366, %v333
  %v368 = vpop.permute.xlu0 %367
  %371 = vset.pattern.permute.xlu0 0
  %372 = vperm.xlu0 %371, %v334
  %v373 = vpop.permute.xlu0 %372
  %376 = vset.pattern.permute.xlu0 0
  %377 = vperm.xlu0 %376, %v335
  %v378 = vpop.permute.xlu0 %377
  %381 = vset.pattern.permute.xlu0 0
  %382 = vperm.xlu0 %381, %v336
  %v383 = vpop.permute.xlu0 %382
  %386 = vset.pattern.permute.xlu0 0
  %387 = vperm.xlu0 %386, %v337
  %v388 = vpop.permute.xlu0 %387
  %391 = vset.pattern.permute.xlu0 0
  %392 = vperm.xlu0 %391, %v338
  %v393 = vpop.permute.xlu0 %392
  %396 = vset.pattern.permute.xlu0 0
  %397 = vperm.xlu0 %396, %v339
  %v398 = vpop.permute.xlu0 %397
  %401 = vset.pattern.permute.xlu0 0
  %402 = vperm.xlu0 %401, %v340
  %v403 = vpop.permute.xlu0 %402
  %v405 = vsub.f32 %v117, %v368
  %v406 = vsub.f32 %v143, %v373
  %v407 = vsub.f32 %v169, %v378
  %v408 = vsub.f32 %v195, %v383
  %v409 = vsub.f32 %v221, %v388
  %v410 = vsub.f32 %v247, %v393
  %v411 = vsub.f32 %v273, %v398
  %v412 = vsub.f32 %v299, %v403
  %v413 = vmul.f32 %v405, 1.442695
  %v414 = vpow.pop %v413
  %v415 = vmul.f32 %v406, 1.442695
  %v416 = vpow.pop %v415
  %v417 = vmul.f32 %v407, 1.442695
  %v418 = vpow.pop %v417
  %v419 = vmul.f32 %v408, 1.442695
  %v420 = vpow.pop %v419
  %v421 = vmul.f32 %v409, 1.442695
  %v422 = vpow.pop %v421
  %v423 = vmul.f32 %v410, 1.442695
  %v424 = vpow.pop %v423
  %v425 = vmul.f32 %v411, 1.442695
  %v426 = vpow.pop %v425
  %v427 = vmul.f32 %v412, 1.442695
  %v428 = vpow.pop %v427
  %v429 = vld [vmem:[#allocation4] sm:$0xff]
  %v430 = vld [vmem:[#allocation4 + $0x8] sm:$0xff]
  %v431 = vld [vmem:[#allocation4 + $0x10] sm:$0xff]
  %v432 = vld [vmem:[#allocation4 + $0x18] sm:$0xff]
  %v433 = vld [vmem:[#allocation4 + $0x20] sm:$0xff]
  %v434 = vld [vmem:[#allocation4 + $0x28] sm:$0xff]
  %v435 = vld [vmem:[#allocation4 + $0x30] sm:$0xff]
  %v436 = vld [vmem:[#allocation4 + $0x38] sm:$0xff]
  %v437 = vmul.f32 %v350, %v429
  %v438 = vmul.f32 %v352, %v430
  %v439 = vmul.f32 %v354, %v431
  %v440 = vmul.f32 %v356, %v432
  %v441 = vmul.f32 %v358, %v433
  %v442 = vmul.f32 %v360, %v434
  %v443 = vmul.f32 %v362, %v435
  %v444 = vmul.f32 %v364, %v436
  %v445 = vsel %vm92, %v414, 0.0
  %446 = vadd.xlane.f32.xlu0 %v445
  %v447 = vpop.xlane.xlu0 %446
  %v448 = vsel %vm92, %v416, 0.0
  %449 = vadd.xlane.f32.xlu0 %v448
  %v450 = vpop.xlane.xlu0 %449
  %v451 = vsel %vm92, %v418, 0.0
  %452 = vadd.xlane.f32.xlu0 %v451
  %v453 = vpop.xlane.xlu0 %452
  %v454 = vsel %vm92, %v420, 0.0
  %455 = vadd.xlane.f32.xlu0 %v454
  %v456 = vpop.xlane.xlu0 %455
  %v457 = vsel %vm92, %v422, 0.0
  %458 = vadd.xlane.f32.xlu0 %v457
  %v459 = vpop.xlane.xlu0 %458
  %v460 = vsel %vm92, %v424, 0.0
  %461 = vadd.xlane.f32.xlu0 %v460
  %v462 = vpop.xlane.xlu0 %461
  %v463 = vsel %vm92, %v426, 0.0
  %464 = vadd.xlane.f32.xlu0 %v463
  %v465 = vpop.xlane.xlu0 %464
  %v466 = vsel %vm92, %v428, 0.0
  %467 = vadd.xlane.f32.xlu0 %v466
  %v468 = vpop.xlane.xlu0 %467
  %v469 = vadd.f32 %v437, %v447
  %v470 = vadd.f32 %v438, %v450
  %v471 = vadd.f32 %v439, %v453
  %v472 = vadd.f32 %v440, %v456
  %v473 = vadd.f32 %v441, %v459
  %v474 = vadd.f32 %v442, %v462
  %v475 = vadd.f32 %v443, %v465
  %v476 = vadd.f32 %v444, %v468
  %vm477 = vcmask 7168
  %478 = vst.msk [vmem:[#allocation4] sm:$0xff] %vm477, %v469
  %479 = vst.msk [vmem:[#allocation4 + $0x8] sm:$0xff] %vm477, %v470
  %480 = vst.msk [vmem:[#allocation4 + $0x10] sm:$0xff] %vm477, %v471
  %481 = vst.msk [vmem:[#allocation4 + $0x18] sm:$0xff] %vm477, %v472
  %482 = vst.msk [vmem:[#allocation4 + $0x20] sm:$0xff] %vm477, %v473
  %483 = vst.msk [vmem:[#allocation4 + $0x28] sm:$0xff] %vm477, %v474
  %484 = vst.msk [vmem:[#allocation4 + $0x30] sm:$0xff] %vm477, %v475
  %485 = vst.msk [vmem:[#allocation4 + $0x38] sm:$0xff] %vm477, %v476
  %v486 = vld [vmem:[#allocation5] sm:$0xff]
  %v487 = vld [vmem:[#allocation5 + $0x8] sm:$0xff]
  %v488 = vld [vmem:[#allocation5 + $0x10] sm:$0xff]
  %v489 = vld [vmem:[#allocation5 + $0x18] sm:$0xff]
  %v490 = vld [vmem:[#allocation5 + $0x20] sm:$0xff]
  %v491 = vld [vmem:[#allocation5 + $0x28] sm:$0xff]
  %v492 = vld [vmem:[#allocation5 + $0x30] sm:$0xff]
  %v493 = vld [vmem:[#allocation5 + $0x38] sm:$0xff]
  %495 = vset.pattern.permute.xlu0 0
  %496 = vperm.xlu0 %495, %v350
  %v497 = vpop.permute.xlu0 %496
  %500 = vset.pattern.permute.xlu0 0
  %501 = vperm.xlu0 %500, %v352
  %v502 = vpop.permute.xlu0 %501
  %505 = vset.pattern.permute.xlu0 0
  %506 = vperm.xlu0 %505, %v354
  %v507 = vpop.permute.xlu0 %506
  %510 = vset.pattern.permute.xlu0 0
  %511 = vperm.xlu0 %510, %v356
  %v512 = vpop.permute.xlu0 %511
  %515 = vset.pattern.permute.xlu0 0
  %516 = vperm.xlu0 %515, %v358
  %v517 = vpop.permute.xlu0 %516
  %520 = vset.pattern.permute.xlu0 0
  %521 = vperm.xlu0 %520, %v360
  %v522 = vpop.permute.xlu0 %521
  %525 = vset.pattern.permute.xlu0 0
  %526 = vperm.xlu0 %525, %v362
  %v527 = vpop.permute.xlu0 %526
  %530 = vset.pattern.permute.xlu0 0
  %531 = vperm.xlu0 %530, %v364
  %v532 = vpop.permute.xlu0 %531
  %v534 = vmul.f32 %v497, %v486
  %v535 = vmul.f32 %v502, %v487
  %v536 = vmul.f32 %v507, %v488
  %v537 = vmul.f32 %v512, %v489
  %v538 = vmul.f32 %v517, %v490
  %v539 = vmul.f32 %v522, %v491
  %v540 = vmul.f32 %v527, %v492
  %v541 = vmul.f32 %v532, %v493
  %v543 = vsel %vm92, %v414, 0
  %545 = vmatpush.msra.mxu0 0.0
  %546 = vmatpush.msra.mxu0 0.0
  %547 = vmatpush.msra.mxu0 0.0
  %548 = vmatpush.msra.mxu0 0.0
  %549 = vmatpush.msra.mxu0 0.0
  %550 = vmatpush.msra.mxu0 0.0
  %551 = vmatpush.msra.mxu0 0.0
  %552 = vmatpush.msra.mxu0 0.0
  %553 = vmatpush.msra.mxu0 0.0
  %554 = vmatpush.msra.mxu0 0.0
  %555 = vmatpush.msra.mxu0 0.0
  %556 = vmatpush.msra.mxu0 0.0
  %557 = vmatpush.msra.mxu0 0.0
  %558 = vmatpush.msra.mxu0 0.0
  %559 = vmatpush.msra.mxu0 0.0
  %560 = vmatpush.msra.mxu0 %v84
  %561 = vmatmul.f32.gmra.mxu0 %v543
  %v562 = vpop.f32.mrf.mxu0
  %v563 = vadd.f32 0.0, %v562
  %564 = vdwg.mxu0
  %v566 = vsel %vm92, %v416, 0
  %568 = vmatpush.msra.mxu0 0.0
  %569 = vmatpush.msra.mxu0 0.0
  %570 = vmatpush.msra.mxu0 0.0
  %571 = vmatpush.msra.mxu0 0.0
  %572 = vmatpush.msra.mxu0 0.0
  %573 = vmatpush.msra.mxu0 0.0
  %574 = vmatpush.msra.mxu0 0.0
  %575 = vmatpush.msra.mxu0 0.0
  %576 = vmatpush.msra.mxu0 0.0
  %577 = vmatpush.msra.mxu0 0.0
  %578 = vmatpush.msra.mxu0 0.0
  %579 = vmatpush.msra.mxu0 0.0
  %580 = vmatpush.msra.mxu0 0.0
  %581 = vmatpush.msra.mxu0 0.0
  %582 = vmatpush.msra.mxu0 0.0
  %583 = vmatpush.msra.mxu0 %v85
  %584 = vmatmul.f32.gmra.mxu0 %v566
  %v585 = vpop.f32.mrf.mxu0
  %v586 = vadd.f32 0.0, %v585
  %587 = vdwg.mxu0
  %v589 = vsel %vm92, %v418, 0
  %591 = vmatpush.msra.mxu0 0.0
  %592 = vmatpush.msra.mxu0 0.0
  %593 = vmatpush.msra.mxu0 0.0
  %594 = vmatpush.msra.mxu0 0.0
  %595 = vmatpush.msra.mxu0 0.0
  %596 = vmatpush.msra.mxu0 0.0
  %597 = vmatpush.msra.mxu0 0.0
  %598 = vmatpush.msra.mxu0 0.0
  %599 = vmatpush.msra.mxu0 0.0
  %600 = vmatpush.msra.mxu0 0.0
  %601 = vmatpush.msra.mxu0 0.0
  %602 = vmatpush.msra.mxu0 0.0
  %603 = vmatpush.msra.mxu0 0.0
  %604 = vmatpush.msra.mxu0 0.0
  %605 = vmatpush.msra.mxu0 0.0
  %606 = vmatpush.msra.mxu0 %v86
  %607 = vmatmul.f32.gmra.mxu0 %v589
  %v608 = vpop.f32.mrf.mxu0
  %v609 = vadd.f32 0.0, %v608
  %610 = vdwg.mxu0
  %v612 = vsel %vm92, %v420, 0
  %614 = vmatpush.msra.mxu0 0.0
  %615 = vmatpush.msra.mxu0 0.0
  %616 = vmatpush.msra.mxu0 0.0
  %617 = vmatpush.msra.mxu0 0.0
  %618 = vmatpush.msra.mxu0 0.0
  %619 = vmatpush.msra.mxu0 0.0
  %620 = vmatpush.msra.mxu0 0.0
  %621 = vmatpush.msra.mxu0 0.0
  %622 = vmatpush.msra.mxu0 0.0
  %623 = vmatpush.msra.mxu0 0.0
  %624 = vmatpush.msra.mxu0 0.0
  %625 = vmatpush.msra.mxu0 0.0
  %626 = vmatpush.msra.mxu0 0.0
  %627 = vmatpush.msra.mxu0 0.0
  %628 = vmatpush.msra.mxu0 0.0
  %629 = vmatpush.msra.mxu0 %v87
  %630 = vmatmul.f32.gmra.mxu0 %v612
  %v631 = vpop.f32.mrf.mxu0
  %v632 = vadd.f32 0.0, %v631
  %633 = vdwg.mxu0
  %v635 = vsel %vm92, %v422, 0
  %637 = vmatpush.msra.mxu0 0.0
  %638 = vmatpush.msra.mxu0 0.0
  %639 = vmatpush.msra.mxu0 0.0
  %640 = vmatpush.msra.mxu0 0.0
  %641 = vmatpush.msra.mxu0 0.0
  %642 = vmatpush.msra.mxu0 0.0
  %643 = vmatpush.msra.mxu0 0.0
  %644 = vmatpush.msra.mxu0 0.0
  %645 = vmatpush.msra.mxu0 0.0
  %646 = vmatpush.msra.mxu0 0.0
  %647 = vmatpush.msra.mxu0 0.0
  %648 = vmatpush.msra.mxu0 0.0
  %649 = vmatpush.msra.mxu0 0.0
  %650 = vmatpush.msra.mxu0 0.0
  %651 = vmatpush.msra.mxu0 0.0
  %652 = vmatpush.msra.mxu0 %v88
  %653 = vmatmul.f32.gmra.mxu0 %v635
  %v654 = vpop.f32.mrf.mxu0
  %v655 = vadd.f32 0.0, %v654
  %656 = vdwg.mxu0
  %v658 = vsel %vm92, %v424, 0
  %660 = vmatpush.msra.mxu0 0.0
  %661 = vmatpush.msra.mxu0 0.0
  %662 = vmatpush.msra.mxu0 0.0
  %663 = vmatpush.msra.mxu0 0.0
  %664 = vmatpush.msra.mxu0 0.0
  %665 = vmatpush.msra.mxu0 0.0
  %666 = vmatpush.msra.mxu0 0.0
  %667 = vmatpush.msra.mxu0 0.0
  %668 = vmatpush.msra.mxu0 0.0
  %669 = vmatpush.msra.mxu0 0.0
  %670 = vmatpush.msra.mxu0 0.0
  %671 = vmatpush.msra.mxu0 0.0
  %672 = vmatpush.msra.mxu0 0.0
  %673 = vmatpush.msra.mxu0 0.0
  %674 = vmatpush.msra.mxu0 0.0
  %675 = vmatpush.msra.mxu0 %v89
  %676 = vmatmul.f32.gmra.mxu0 %v658
  %v677 = vpop.f32.mrf.mxu0
  %v678 = vadd.f32 0.0, %v677
  %679 = vdwg.mxu0
  %v681 = vsel %vm92, %v426, 0
  %683 = vmatpush.msra.mxu0 0.0
  %684 = vmatpush.msra.mxu0 0.0
  %685 = vmatpush.msra.mxu0 0.0
  %686 = vmatpush.msra.mxu0 0.0
  %687 = vmatpush.msra.mxu0 0.0
  %688 = vmatpush.msra.mxu0 0.0
  %689 = vmatpush.msra.mxu0 0.0
  %690 = vmatpush.msra.mxu0 0.0
  %691 = vmatpush.msra.mxu0 0.0
  %692 = vmatpush.msra.mxu0 0.0
  %693 = vmatpush.msra.mxu0 0.0
  %694 = vmatpush.msra.mxu0 0.0
  %695 = vmatpush.msra.mxu0 0.0
  %696 = vmatpush.msra.mxu0 0.0
  %697 = vmatpush.msra.mxu0 0.0
  %698 = vmatpush.msra.mxu0 %v90
  %699 = vmatmul.f32.gmra.mxu0 %v681
  %v700 = vpop.f32.mrf.mxu0
  %v701 = vadd.f32 0.0, %v700
  %702 = vdwg.mxu0
  %v704 = vsel %vm92, %v428, 0
  %706 = vmatpush.msra.mxu0 0.0
  %707 = vmatpush.msra.mxu0 0.0
  %708 = vmatpush.msra.mxu0 0.0
  %709 = vmatpush.msra.mxu0 0.0
  %710 = vmatpush.msra.mxu0 0.0
  %711 = vmatpush.msra.mxu0 0.0
  %712 = vmatpush.msra.mxu0 0.0
  %713 = vmatpush.msra.mxu0 0.0
  %714 = vmatpush.msra.mxu0 0.0
  %715 = vmatpush.msra.mxu0 0.0
  %716 = vmatpush.msra.mxu0 0.0
  %717 = vmatpush.msra.mxu0 0.0
  %718 = vmatpush.msra.mxu0 0.0
  %719 = vmatpush.msra.mxu0 0.0
  %720 = vmatpush.msra.mxu0 0.0
  %721 = vmatpush.msra.mxu0 %v91
  %722 = vmatmul.f32.gmra.mxu0 %v704
  %v723 = vpop.f32.mrf.mxu0
  %v724 = vadd.f32 0.0, %v723
  %725 = vdwg.mxu0
  %v726 = vadd.f32 %v534, %v563
  %v727 = vadd.f32 %v535, %v586
  %v728 = vadd.f32 %v536, %v609
  %v729 = vadd.f32 %v537, %v632
  %v730 = vadd.f32 %v538, %v655
  %v731 = vadd.f32 %v539, %v678
  %v732 = vadd.f32 %v540, %v701
  %v733 = vadd.f32 %v541, %v724
  %734 = vst.msk [vmem:[#allocation5] sm:$0xff] %vm92, %v726
  %735 = vst.msk [vmem:[#allocation5 + $0x8] sm:$0xff] %vm92, %v727
  %736 = vst.msk [vmem:[#allocation5 + $0x10] sm:$0xff] %vm92, %v728
  %737 = vst.msk [vmem:[#allocation5 + $0x18] sm:$0xff] %vm92, %v729
  %738 = vst.msk [vmem:[#allocation5 + $0x20] sm:$0xff] %vm92, %v730
  %739 = vst.msk [vmem:[#allocation5 + $0x28] sm:$0xff] %vm92, %v731
  %740 = vst.msk [vmem:[#allocation5 + $0x30] sm:$0xff] %vm92, %v732
  %741 = vst.msk [vmem:[#allocation5 + $0x38] sm:$0xff] %vm92, %v733
  %742 = vst.msk [vmem:[#allocation3] sm:$0xff] %vm477, %v333
  %743 = vst.msk [vmem:[#allocation3 + $0x8] sm:$0xff] %vm477, %v334
  %744 = vst.msk [vmem:[#allocation3 + $0x10] sm:$0xff] %vm477, %v335
  %745 = vst.msk [vmem:[#allocation3 + $0x18] sm:$0xff] %vm477, %v336
  %746 = vst.msk [vmem:[#allocation3 + $0x20] sm:$0xff] %vm477, %v337
  %747 = vst.msk [vmem:[#allocation3 + $0x28] sm:$0xff] %vm477, %v338
  %748 = vst.msk [vmem:[#allocation3 + $0x30] sm:$0xff] %vm477, %v339
  %749 = vst.msk [vmem:[#allocation3 + $0x38] sm:$0xff] %vm477, %v340
  // Predicated region
  $region18: #{attention_forward.8} parent=0 // pred_check
    %p750 = pneg %p14
  $region19: #{attention_forward.8} parent=0 // pred_check_branch
    %752 = sbr.rel (%p750) target = $region21
  $region20: #{attention_forward.8} parent=0 // pred_region
    %v753 = vld [vmem:[#allocation4] sm:$0xff]
    %v754 = vld [vmem:[#allocation4 + $0x8] sm:$0xff]
    %v755 = vld [vmem:[#allocation4 + $0x10] sm:$0xff]
    %v756 = vld [vmem:[#allocation4 + $0x18] sm:$0xff]
    %v757 = vld [vmem:[#allocation4 + $0x20] sm:$0xff]
    %v758 = vld [vmem:[#allocation4 + $0x28] sm:$0xff]
    %v759 = vld [vmem:[#allocation4 + $0x30] sm:$0xff]
    %v760 = vld [vmem:[#allocation4 + $0x38] sm:$0xff]
    %v761 = vrcp.pop %v753
    %v762 = vrcp.pop %v754
    %v763 = vrcp.pop %v755
    %v764 = vrcp.pop %v756
    %v765 = vrcp.pop %v757
    %v766 = vrcp.pop %v758
    %v767 = vrcp.pop %v759
    %v768 = vrcp.pop %v760
    %v769 = vld [vmem:[#allocation5] sm:$0xff]
    %v770 = vld [vmem:[#allocation5 + $0x8] sm:$0xff]
    %v771 = vld [vmem:[#allocation5 + $0x10] sm:$0xff]
    %v772 = vld [vmem:[#allocation5 + $0x18] sm:$0xff]
    %v773 = vld [vmem:[#allocation5 + $0x20] sm:$0xff]
    %v774 = vld [vmem:[#allocation5 + $0x28] sm:$0xff]
    %v775 = vld [vmem:[#allocation5 + $0x30] sm:$0xff]
    %v776 = vld [vmem:[#allocation5 + $0x38] sm:$0xff]
    %778 = vset.pattern.permute.xlu0 0
    %779 = vperm.xlu0 %778, %v761
    %v780 = vpop.permute.xlu0 %779
    %783 = vset.pattern.permute.xlu0 0
    %784 = vperm.xlu0 %783, %v762
    %v785 = vpop.permute.xlu0 %784
    %788 = vset.pattern.permute.xlu0 0
    %789 = vperm.xlu0 %788, %v763
    %v790 = vpop.permute.xlu0 %789
    %793 = vset.pattern.permute.xlu0 0
    %794 = vperm.xlu0 %793, %v764
    %v795 = vpop.permute.xlu0 %794
    %798 = vset.pattern.permute.xlu0 0
    %799 = vperm.xlu0 %798, %v765
    %v800 = vpop.permute.xlu0 %799
    %803 = vset.pattern.permute.xlu0 0
    %804 = vperm.xlu0 %803, %v766
    %v805 = vpop.permute.xlu0 %804
    %808 = vset.pattern.permute.xlu0 0
    %809 = vperm.xlu0 %808, %v767
    %v810 = vpop.permute.xlu0 %809
    %813 = vset.pattern.permute.xlu0 0
    %814 = vperm.xlu0 %813, %v768
    %v815 = vpop.permute.xlu0 %814
    %v817 = vmul.f32 %v769, %v780
    %v818 = vmul.f32 %v770, %v785
    %v819 = vmul.f32 %v771, %v790
    %v820 = vmul.f32 %v772, %v795
    %v821 = vmul.f32 %v773, %v800
    %v822 = vmul.f32 %v774, %v805
    %v823 = vmul.f32 %v775, %v810
    %v824 = vmul.f32 %v776, %v815
    %825 = vst.msk [vmem:[%s3] sm:$0xff] %vm92, %v817
    %826 = vst.msk [vmem:[%s3 + $0x8] sm:$0xff] %vm92, %v818
    %827 = vst.msk [vmem:[%s3 + $0x10] sm:$0xff] %vm92, %v819
    %828 = vst.msk [vmem:[%s3 + $0x18] sm:$0xff] %vm92, %v820
    %829 = vst.msk [vmem:[%s3 + $0x20] sm:$0xff] %vm92, %v821
    %830 = vst.msk [vmem:[%s3 + $0x28] sm:$0xff] %vm92, %v822
    %831 = vst.msk [vmem:[%s3 + $0x30] sm:$0xff] %vm92, %v823
    %832 = vst.msk [vmem:[%s3 + $0x38] sm:$0xff] %vm92, %v824
  $region21: #{attention_forward.8} parent=0 // pred_fallthru
    _
  // Predicated region
  $region22: #{attention_forward.8} parent=0 // pred_check
    _
  $region23: #{attention_forward.8} parent=0 // pred_check_branch
    %834 = sbr.rel (0) target = $region25
  $region24: #{attention_forward.8} parent=0 // pred_region
    _
  $region25: #{attention_forward.8} parent=0 // pred_fallthru
    _
  // Predicated region
  $region26: #{attention_forward.8} parent=0 // pred_check
    _
  $region27: #{attention_forward.8} parent=0 // pred_check_branch
    %836 = sbr.rel (0) target = $region29
  $region28: #{attention_forward.8} parent=0 // pred_region
    _
  $region29: #{attention_forward.8} parent=0 // pred_fallthru
    _

</llo_original>
